<compile_context>
chip_gen: v7x
topology: tpu7x:2x2x1
jax: 0.10.0
libtpu: 0.0.40
codegen_flags: <defaults>
</compile_context>

<pallas_src>
import functools

import jax
import jax.numpy as jnp
from jax.experimental import pallas as pl
from jax.experimental.pallas import tpu as pltpu

ALPHA = 1.0
GAMMA = 2.0          # exploited as an explicit square in the epilogue

_MIB = 1024 * 1024


def _vmem_capacity_bytes():
    """Per-TensorCore VMEM capacity; conservative 64 MiB fallback."""
    try:
        cap = getattr(pltpu.get_tpu_info(), "vmem_capacity_bytes", None)
        if cap:
            return int(cap)
    except Exception:
        pass
    return 64 * _MIB


def _detect_num_cores():
    """2 for chips whose TensorCores share one JAX device (megacore v4/v5p,
    dual-core v7x); 1 otherwise.  Purely a perf knob, never correctness."""
    try:
        kind = jax.devices()[0].device_kind.lower()
    except Exception:
        return 1
    if any(s in kind for s in ("v7", "7x", "v4", "v5p")):
        return 2
    return 1


def _choose_tile_n(n, c_dim, itemsize, block_budget, vmem_limit):
    """Largest row tile such that (a) one logits block stays within the
    per-generation byte budget and (b) double-buffered inputs + lane-dense
    targets + ~5x f32 temporaries fit the scoped-VMEM limit.  Multi-tile row
    counts are multiples of 128 so the (1, tile_n) targets block is lane-dense."""
    if n * c_dim * itemsize <= block_budget:
        return n                                     # single full-batch tile
    rows_block = block_budget // (c_dim * itemsize)
    per_row = 2 * c_dim * itemsize + 2 * 8 * 4 + 5 * c_dim * 4
    rows_vmem = max(0, vmem_limit - 8 * _MIB) // per_row
    rows = max(128, (min(rows_block, rows_vmem) // 128) * 128)
    return int(min(rows, n))


def _sanitize_tile_n(tile_n, n):
    if tile_n >= n:
        return n
    tile_n = max(128, (tile_n // 128) * 128)
    return n if tile_n >= n else int(tile_n)


def _focal_partial_kernel(logits_ref, targets_ref, out_ref, acc_ref, *,
                          n_total, tiles_per_core):
    tile_n, c_dim = logits_ref.shape
    c = pl.program_id(0)          # core-split axis ("parallel")
    i = pl.program_id(1)          # N-reduction axis ("arbitrary")

    @pl.when(i == 0)
    def _init():
        acc_ref[...] = jnp.zeros_like(acc_ref)

    logical_block = c * tiles_per_core + i
    rows_remaining = n_total - logical_block * tile_n      # may be <= 0

    # f32 compute; zero every row past the true batch so stale VMEM in a
    # ragged last block (or a clamped fully-out-of-range block) can never
    # push NaN/Inf through the MXU contractions below.
    x = logits_ref[...].astype(jnp.float32)                # (tile_n, C)
    row_ids = jax.lax.broadcasted_iota(jnp.int32, (tile_n, 1), 0)
    x = jnp.where(row_ids < rows_remaining, x, 0.0)

    # Numerically stable per-row logsumexp(x).
    m = jnp.max(x, axis=-1, keepdims=True)                  # (tile_n, 1)
    e = jnp.exp(x - m)
    lse = m + jnp.log(jnp.sum(e, axis=-1, keepdims=True))   # (tile_n, 1)

    # Sample-validity mask, lane oriented (samples live on lanes below).
    samp_ids = jax.lax.broadcasted_iota(jnp.int32, (1, tile_n), 1)
    valid = (samp_ids < rows_remaining).astype(jnp.float32)  # (1, tile_n)

    # sum over valid rows of logsumexp(x):  (1,K) @ (K,1) on the MXU.
    lse_sum = jnp.dot(valid, lse,
                      precision=jax.lax.Precision.HIGHEST,
                      preferred_element_type=jnp.float32)    # (1, 1)

    # sum over valid rows of x[r, t_r] = trace(onehot @ x); the one-hot is
    # built in (C, tile_n) orientation straight from the lane-dense targets,
    # so no lane<->sublane relayout is needed.  Rows >= N were zeroed above,
    # so garbage targets in the padded region contribute exactly 0.
    t = targets_ref[...]                                     # (1, tile_n) int32
    cls = jax.lax.broadcasted_iota(jnp.int32, (c_dim, 1), 0)
    onehot = (cls == t).astype(jnp.float32)                  # (C, tile_n)
    g = jnp.dot(onehot, x,
                precision=jax.lax.Precision.HIGHEST,
                preferred_element_type=jnp.float32)           # (C, C)
    eye = (jax.lax.broadcasted_iota(jnp.int32, (c_dim, c_dim), 0) ==
           jax.lax.broadcasted_iota(jnp.int32, (c_dim, c_dim), 1))
    tgt_sum = jnp.sum(jnp.where(eye, g, 0.0))

    # O(1) accumulator update per grid step (heavy reductions live on the MXU).
    acc_ref[...] += lse_sum - tgt_sum

    @pl.when(i == pl.num_programs(1) - 1)
    def _finalize():
        # One lane-dense write per core; only [c, 0, 0] is consumed outside.
        out_ref[...] = jnp.broadcast_to(acc_ref[...], out_ref.shape)


def focal_loss(logits, targets, *, tile_n=None):
    """logits: (N, C) float (f32 or bf16), targets: (N,) int -> () f32 scalar."""
    n, c_dim = logits.shape
    itemsize = jnp.dtype(logits.dtype).itemsize
    targets_row = targets.reshape(1, n).astype(jnp.int32)    # lane-dense targets

    vmem_cap = _vmem_capacity_bytes()
    vmem_limit = int(min(max(vmem_cap - 16 * _MIB, 32 * _MIB), 100 * _MIB))
    block_budget = 8 * _MIB if vmem_cap >= 100 * _MIB else 4 * _MIB

    if tile_n is None:
        tile_n = _choose_tile_n(n, c_dim, itemsize, block_budget, vmem_limit)
    else:
        tile_n = _sanitize_tile_n(int(tile_n), n)

    n_tiles = pl.cdiv(n, tile_n)
    num_cores = max(1, min(_detect_num_cores(), n_tiles))
    tiles_per_core = pl.cdiv(n_tiles, num_cores)

    def logits_map(c, i):
        # Clamp blocks that fall entirely past the batch; their rows are
        # zeroed/masked inside the kernel, so the data read is irrelevant.
        b = jnp.minimum(c * tiles_per_core + i, n_tiles - 1)
        return (b, 0)

    def targets_map(c, i):
        b = jnp.minimum(c * tiles_per_core + i, n_tiles - 1)
        return (0, b)

    kernel = functools.partial(_focal_partial_kernel,
                               n_total=n, tiles_per_core=tiles_per_core)

    partials = pl.pallas_call(
        kernel,
        out_shape=jax.ShapeDtypeStruct((num_cores, 8, 128), jnp.float32),
        grid_spec=pltpu.PrefetchScalarGridSpec(
            num_scalar_prefetch=0,
            grid=(num_cores, tiles_per_core),
            in_specs=[
                pl.BlockSpec((tile_n, c_dim), logits_map),
                pl.BlockSpec((1, tile_n), targets_map),
            ],
            out_specs=pl.BlockSpec((1, 8, 128), lambda c, i: (c, 0, 0)),
            scratch_shapes=[pltpu.VMEM((1, 1), jnp.float32)],
        ),
        compiler_params=pltpu.CompilerParams(
            dimension_semantics=("parallel", "arbitrary"),
            vmem_limit_bytes=vmem_limit,
        ),
    )(logits, targets_row)

    # Tiny scalar epilogue in plain JAX (combine the per-core partial sums).
    bce = jnp.sum(partials[:, 0, 0]) / jnp.float32(n)
    pt = jnp.exp(-bce)
    one_minus_pt = 1.0 - pt
    return ALPHA * one_minus_pt * one_minus_pt * bce         # gamma == 2 -> square


def focal_loss_ref(logits, targets):
    """Pure-JAX reference matching the PyTorch module."""
    logp = jax.nn.log_softmax(logits.astype(jnp.float32), axis=-1)
    nll = -jnp.take_along_axis(logp, targets[:, None].astype(jnp.int32), axis=-1)[:, 0]
    bce = jnp.mean(nll)
    pt = jnp.exp(-bce)
    return ALPHA * (1.0 - pt) ** GAMMA * bce


if __name__ == "__main__":
    key = jax.random.PRNGKey(0)

    def _check(lg, tg, tile_n=None, tol=2e-3):
        out = focal_loss(lg, tg, tile_n=tile_n)
        jax.block_until_ready(out)
        ref = focal_loss_ref(lg, tg)
        assert jnp.allclose(out, ref, atol=tol, rtol=tol), (out, ref)

    # 1) multi-tile accumulation, odd tile count (exercises the clamped,
    #    fully-masked block when the work splits across two cores).
    k1, k2, key = jax.random.split(key, 3)
    _check(jax.random.normal(k1, (384, 32), dtype=jnp.float32),
           jax.random.randint(k2, (384,), 0, 32, dtype=jnp.int32), tile_n=128)

    # 2) ragged batch (N not a multiple of the tile): masking keeps BCE unbiased.
    k1, k2, key = jax.random.split(key, 3)
    _check(jax.random.normal(k1, (300, 32), dtype=jnp.float32),
           jax.random.randint(k2, (300,), 0, 32, dtype=jnp.int32), tile_n=128)

    # 3) tiny batch, auto tile size (single full-batch tile).
    k1, k2, key = jax.random.split(key, 3)
    _check(jax.random.normal(k1, (16, 8), dtype=jnp.float32),
           jax.random.randint(k2, (16,), 0, 8, dtype=jnp.int32))

    # 4) bf16 logits stay narrow in HBM; compute is f32 in-kernel.
    k1, k2, key = jax.random.split(key, 3)
    _check(jax.random.normal(k1, (256, 32), dtype=jnp.bfloat16),
           jax.random.randint(k2, (256,), 0, 32, dtype=jnp.int32), tile_n=128)

    print("KERNEL_OK")
</pallas_src>

<mosaic_0001>
module attributes {stable_mosaic.version = 11 : i64} {
  func.func @_focal_partial_kernel(%arg0: i32, %arg1: i32, %arg2: memref<128x32xf32, #tpu.memory_space<vmem>>, %arg3: memref<1x128xi32, #tpu.memory_space<vmem>>, %arg4: memref<1x8x128xf32, #tpu.memory_space<vmem>>, %arg5: memref<1x1xf32, #tpu.memory_space<vmem>>) attributes {dimension_semantics = [#tpu.dimension_semantics<parallel>, #tpu.dimension_semantics<arbitrary>], iteration_bounds = array<i64: 1, 3>, scalar_prefetch = 0 : i64, scratch_operands = 1 : i64, tpu.core_type = #tpu.core_type<tc>, window_params = [{transform_indices = @transform_0, window_bounds = array<i64: 128, 32>}, {transform_indices = @transform_1, window_bounds = array<i64: 1, 128>}, {transform_indices = @transform_2, window_bounds = array<i64: 1, 8, 128>}]} {
    %c0_i32 = arith.constant 0 : i32
    %0 = arith.cmpi eq, %arg1, %c0_i32 : i32
    %1 = arith.extui %0 : i1 to i32
    %c0_i32_0 = arith.constant 0 : i32
    %2 = arith.cmpi ne, %1, %c0_i32_0 : i32
    scf.if %2 {
      %cst_15 = arith.constant 0.000000e+00 : f32
      %55 = vector.broadcast %cst_15 : f32 to vector<1x1xf32>
      %c0_16 = arith.constant 0 : index
      %c0_17 = arith.constant 0 : index
      %56 = vector.load %arg5[%c0_16, %c0_17] : memref<1x1xf32, #tpu.memory_space<vmem>>, vector<1x1xf32>
      tpu.vector_store %arg5[%c0_16, %c0_17], %55 {strides = array<i32>} : memref<1x1xf32, #tpu.memory_space<vmem>>, vector<1x1xf32>,
    } else {
    }
    %c3_i32 = arith.constant 3 : i32
    %3 = arith.muli %arg0, %c3_i32 : i32
    %4 = arith.addi %3, %arg1 : i32
    %c128_i32 = arith.constant 128 : i32
    %5 = arith.muli %4, %c128_i32 : i32
    %c384_i32 = arith.constant 384 : i32
    %6 = arith.subi %c384_i32, %5 : i32
    %c0 = arith.constant 0 : index
    %c0_1 = arith.constant 0 : index
    %7 = vector.load %arg2[%c0, %c0_1] : memref<128x32xf32, #tpu.memory_space<vmem>>, vector<128x32xf32>
    %8 = tpu.iota {dimensions = array<i32: 0>} : vector<128x1xi32>
    %9 = vector.broadcast %6 : i32 to vector<128x1xi32>
    %10 = arith.cmpi slt, %8, %9 : vector<128x1xi32>
    %cst = arith.constant 0.000000e+00 : f32
    %11 = vector.shape_cast %10 : vector<128x1xi1> to vector<128x1xi1>
    %12 = vector.broadcast %11 : vector<128x1xi1> to vector<128x32xi1>
    %13 = vector.broadcast %cst : f32 to vector<128x32xf32>
    %14 = arith.select %12, %7, %13 : vector<128x32xi1>, vector<128x32xf32>
    %cst_2 = arith.constant dense<0xFF800000> : vector<128xf32>
    %15 = vector.multi_reduction <maximumf>, %14, %cst_2 [1] : vector<128x32xf32> to vector<128xf32>
    %16 = vector.shape_cast %15 : vector<128xf32> to vector<128x1xf32>
    %17 = vector.broadcast %16 : vector<128x1xf32> to vector<128x32xf32>
    %18 = arith.subf %14, %17 : vector<128x32xf32>
    %19 = math.exp %18 : vector<128x32xf32>
    %cst_3 = arith.constant dense<0.000000e+00> : vector<128xf32>
    %20 = vector.multi_reduction <add>, %19, %cst_3 [1] : vector<128x32xf32> to vector<128xf32>
    %21 = vector.shape_cast %20 : vector<128xf32> to vector<128x1xf32>
    %22 = math.log %21 : vector<128x1xf32>
    %23 = arith.addf %16, %22 : vector<128x1xf32>
    %24 = tpu.iota {dimensions = array<i32: 1>} : vector<1x128xi32>
    %25 = vector.broadcast %6 : i32 to vector<1x128xi32>
    %26 = arith.cmpi slt, %24, %25 : vector<1x128xi32>
    %27 = arith.extui %26 : vector<1x128xi1> to vector<1x128xi32>
    %28 = arith.sitofp %27 : vector<1x128xi32> to vector<1x128xf32>
    %cst_4 = arith.constant dense<0.000000e+00> : vector<1x1xf32>
    %29 = tpu.matmul %28, %23, %cst_4 {dimension_numbers = #tpu.dot_dimension_numbers<[1], [0], [0], [1], [0, 0, 1, 1], [], []>, precision = #tpu.contract_precision<fp32>} : vector<1x128xf32>, vector<128x1xf32>, vector<1x1xf32> -> vector<1x1xf32>
    %c0_5 = arith.constant 0 : index
    %c0_6 = arith.constant 0 : index
    %30 = vector.load %arg3[%c0_5, %c0_6] : memref<1x128xi32, #tpu.memory_space<vmem>>, vector<1x128xi32>
    %31 = tpu.iota {dimensions = array<i32: 0>} : vector<32x1xi32>
    %32 = vector.broadcast %31 : vector<32x1xi32> to vector<32x128xi32>
    %33 = vector.broadcast %30 : vector<1x128xi32> to vector<32x128xi32>
    %34 = arith.cmpi eq, %32, %33 : vector<32x128xi32>
    %35 = arith.extui %34 : vector<32x128xi1> to vector<32x128xi32>
    %36 = arith.sitofp %35 : vector<32x128xi32> to vector<32x128xf32>
    %cst_7 = arith.constant dense<0.000000e+00> : vector<32x32xf32>
    %37 = tpu.matmul %36, %14, %cst_7 {dimension_numbers = #tpu.dot_dimension_numbers<[1], [0], [0], [1], [0, 0, 1, 1], [], []>, precision = #tpu.contract_precision<fp32>} : vector<32x128xf32>, vector<128x32xf32>, vector<32x32xf32> -> vector<32x32xf32>
    %38 = tpu.iota {dimensions = array<i32: 0>} : vector<32x32xi32>
    %39 = tpu.iota {dimensions = array<i32: 1>} : vector<32x32xi32>
    %40 = arith.cmpi eq, %38, %39 : vector<32x32xi32>
    %cst_8 = arith.constant 0.000000e+00 : f32
    %41 = vector.broadcast %cst_8 : f32 to vector<32x32xf32>
    %42 = arith.select %40, %37, %41 : vector<32x32xi1>, vector<32x32xf32>
    %43 = vector.shape_cast %42 : vector<32x32xf32> to vector<1x32x32xf32>
    %cst_9 = arith.constant dense<0.000000e+00> : vector<1xf32>
    %44 = vector.multi_reduction <add>, %43, %cst_9 [1, 2] : vector<1x32x32xf32> to vector<1xf32>
    %45 = vector.shape_cast %44 : vector<1xf32> to vector<1x1x1xf32>
    %46 = vector.extract %45[0, 0, 0] : f32 from vector<1x1x1xf32>
    %c0_10 = arith.constant 0 : index
    %c0_11 = arith.constant 0 : index
    %47 = vector.load %arg5[%c0_10, %c0_11] : memref<1x1xf32, #tpu.memory_space<vmem>>, vector<1x1xf32>
    %48 = vector.broadcast %46 : f32 to vector<1x1xf32>
    %49 = arith.subf %29, %48 : vector<1x1xf32>
    %50 = arith.addf %47, %49 : vector<1x1xf32>
    %c0_12 = arith.constant 0 : index
    %c0_13 = arith.constant 0 : index
    %51 = vector.load %arg5[%c0_12, %c0_13] : memref<1x1xf32, #tpu.memory_space<vmem>>, vector<1x1xf32>
    tpu.vector_store %arg5[%c0_12, %c0_13], %50 {strides = array<i32>} : memref<1x1xf32, #tpu.memory_space<vmem>>, vector<1x1xf32>,
    %c2_i32 = arith.constant 2 : i32
    %52 = arith.cmpi eq, %arg1, %c2_i32 : i32
    %53 = arith.extui %52 : i1 to i32
    %c0_i32_14 = arith.constant 0 : i32
    %54 = arith.cmpi ne, %53, %c0_i32_14 : i32
    scf.if %54 {
      %c0_15 = arith.constant 0 : index
      %c0_16 = arith.constant 0 : index
      %55 = vector.load %arg5[%c0_15, %c0_16] : memref<1x1xf32, #tpu.memory_space<vmem>>, vector<1x1xf32>
      %56 = vector.shape_cast %55 : vector<1x1xf32> to vector<1x1x1xf32>
      %57 = vector.broadcast %56 : vector<1x1x1xf32> to vector<1x8x128xf32>
      %c0_17 = arith.constant 0 : index
      %c0_18 = arith.constant 0 : index
      %c0_19 = arith.constant 0 : index
      %58 = vector.load %arg4[%c0_17, %c0_18, %c0_19] : memref<1x8x128xf32, #tpu.memory_space<vmem>>, vector<1x8x128xf32>
      tpu.vector_store %arg4[%c0_17, %c0_18, %c0_19], %57 {strides = array<i32>} : memref<1x8x128xf32, #tpu.memory_space<vmem>>, vector<1x8x128xf32>,
    } else {
    }
    return
  }
  func.func @transform_0(%arg0: i32, %arg1: i32) -> (i32, i32) {
    %c3_i32 = arith.constant 3 : i32
    %0 = arith.muli %arg0, %c3_i32 : i32
    %1 = arith.addi %0, %arg1 : i32
    %c2_i32 = arith.constant 2 : i32
    %2 = arith.minsi %1, %c2_i32 : i32
    %c0_i32 = arith.constant 0 : i32
    %c0_i32_0 = arith.constant 0 : i32
    return %2, %c0_i32 : i32, i32
  }
  func.func @transform_1(%arg0: i32, %arg1: i32) -> (i32, i32) {
    %c3_i32 = arith.constant 3 : i32
    %0 = arith.muli %arg0, %c3_i32 : i32
    %1 = arith.addi %0, %arg1 : i32
    %c2_i32 = arith.constant 2 : i32
    %2 = arith.minsi %1, %c2_i32 : i32
    %c0_i32 = arith.constant 0 : i32
    %c0_i32_0 = arith.constant 0 : i32
    return %c0_i32, %2 : i32, i32
  }
  func.func @transform_2(%arg0: i32, %arg1: i32) -> (i32, i32, i32) {
    %c0_i32 = arith.constant 0 : i32
    %c0_i32_0 = arith.constant 0 : i32
    %c0_i32_1 = arith.constant 0 : i32
    return %arg0, %c0_i32, %c0_i32_0 : i32, i32, i32
  }
}

</mosaic_0001>

<llo_original>
// kernel: tpu_custom_call.1
$region0: #{tpu_custom_call.1}
  #allocation0 [shape = 'u32[]', space=smem, size = 0x4, offset = 0x4, fixed_abs, tag = 'smem constant byte address 0x4 - core index']
  #allocation1 [shape = 'u32[144,128]{1,0:T(1,128)}', space=vmem, size = 0x12000, scoped, tag = 'internal scratch']
  #allocation2 [shape = 'f32[1,1]{1,0:T(1,128)}', space=vmem, size = 0x200, scoped, tag = 'scratch operand']
  %s0 = inlined_call_operand.vmem [shape: f32[384,32], index: 0, kind: input, shape index: {}]
  %s1 = inlined_call_operand.vmem [shape: s32[1,384], index: 1, kind: input, shape index: {}]
  %s2 = inlined_call_operand.hbm [shape: f32[1,8,128], index: 2, kind: output, shape index: {}]
  %s3 = sld [smem:[#allocation0]]
  $region49: #{tpu_custom_call.1} parent=0
    _
  %s5 = ssub.s32 1, %s3
  %s6 = scalar_select 0, %s5, %s3
  $region1: #{tpu_custom_call.1} parent=0
    #allocation3 [shape = 'u8[4096]{0}', space=vmem, size = 0x1000, scoped, tag = 'output window, operand 0, single buffered']
    #allocation4 [shape = 's32[2]{0}', space=sflag, size = 0x8, scoped, tag = 'scoped memory for tpu_custom_call.1']
    %7 = vsyncpa [#allocation4], 0
    loop: start=0, step=1, limit=5
    $region2: #{tpu_custom_call.1} parent=1 // loop_pre_header
      _
    $region3: #{tpu_custom_call.1} parent=1 // loop_header
      %s9 = sphi 0, %s13
      %p10 = scmp.ge.s32.totalorder %s9, 5
      %s16 = sphi 0, %s28
      %s17 = sphi 0, %s24
      %s18 = sphi 0, %s16
      %s19 = sphi 0, %s17
      %s20 = sphi 0, %s18
      %s21 = sphi 0, %s19
      %s39 = sphi 0, %s41
      %s42 = sphi 0, %s39
      %s43 = sphi 0, %s42
      %s59 = sphi 0, %s43
      %s73 = sphi 0, %s75
      %s76 = sphi 0, %s73
      %s77 = sphi 0, %s76
      %s93 = sphi 0, %s77
      %s99 = sphi 0, %s101
      %s102 = sphi 0, %s99
      %s103 = sphi 0, %s102
      %s119 = sphi 0, %s103
    $region4: #{tpu_custom_call.1} parent=1 // loop_header_branch
      %12 = sbr.rel (%p10) target = $region8
    $region5: #{tpu_custom_call.1} parent=1 // loop_body
      %s14 = ssub.s32 %s9, 1
      %s15 = ssub.s32 %s9, 2
      %s22 = sadd.s32 1, %s17
      %p23 = scmp.ge.s32.totalorder %s22, 3
      %s24 = scalar_select %p23, 0, %s22
      %s25 = sadd.s32 1, %s16
      %s26 = scalar_select %p23, %s25, %s16
      %p27 = scmp.ge.s32.totalorder %s26, 1
      %s28 = scalar_select %p27, 0, %s26
      %s29 = smul.u32 %s16, 3
      %s30 = sadd.s32 %s29, %s17
      %p31 = scmp.lt.s32.totalorder %s30, 2
      %s32 = scalar_select %p31, %s30, 2
      %s33 = smul.u32 %s28, 3
      %s34 = sadd.s32 %s33, %s24
      %p35 = scmp.lt.s32.totalorder %s34, 2
      %s36 = scalar_select %p35, %s34, 2
      %s37 = ssub.s32 %s32, %s36
      %p38 = scmp.eq.s32.totalorder %s37, 0
      %s40 = sadd.s32 %s39, 1
      %s41 = scalar_select %p38, %s39, %s40
      %p44 = pneg %p38
      %p45 = scmp.eq.s32.totalorder %s9, 2
      %p46 = por %p44, %p45
      %p47 = scmp.ne.s32.totalorder %s39, %s42
      %p48 = scmp.eq.s32.totalorder %s9, 0
      %p49 = por %p47, %p48
      %p50 = scmp.ne.s32.totalorder %s39, %s42
      %p51 = scmp.eq.s32.totalorder %s14, 2
      %p52 = por %p50, %p51
      %p53 = scmp.ne.s32.totalorder %s42, %s43
      %p54 = scmp.eq.s32.totalorder %s14, 0
      %p55 = por %p53, %p54
      %p56 = scmp.ne.s32.totalorder %s42, %s43
      %p57 = scmp.eq.s32.totalorder %s15, 2
      %p58 = por %p56, %p57
      %p60 = scmp.ne.s32.totalorder %s43, %s59
      %p61 = scmp.eq.s32.totalorder %s15, 0
      %p62 = por %p60, %p61
      %s63 = smul.u32 %s16, 3
      %s64 = sadd.s32 %s63, %s17
      %p65 = scmp.lt.s32.totalorder %s64, 2
      %s66 = scalar_select %p65, %s64, 2
      %s67 = smul.u32 %s28, 3
      %s68 = sadd.s32 %s67, %s24
      %p69 = scmp.lt.s32.totalorder %s68, 2
      %s70 = scalar_select %p69, %s68, 2
      %s71 = ssub.s32 %s66, %s70
      %p72 = scmp.eq.s32.totalorder %s71, 0
      %s74 = sadd.s32 %s73, 1
      %s75 = scalar_select %p72, %s73, %s74
      %p78 = pneg %p72
      %p79 = scmp.eq.s32.totalorder %s9, 2
      %p80 = por %p78, %p79
      %p81 = scmp.ne.s32.totalorder %s73, %s76
      %p82 = scmp.eq.s32.totalorder %s9, 0
      %p83 = por %p81, %p82
      %p84 = scmp.ne.s32.totalorder %s73, %s76
      %p85 = scmp.eq.s32.totalorder %s14, 2
      %p86 = por %p84, %p85
      %p87 = scmp.ne.s32.totalorder %s76, %s77
      %p88 = scmp.eq.s32.totalorder %s14, 0
      %p89 = por %p87, %p88
      %p90 = scmp.ne.s32.totalorder %s76, %s77
      %p91 = scmp.eq.s32.totalorder %s15, 2
      %p92 = por %p90, %p91
      %p94 = scmp.ne.s32.totalorder %s77, %s93
      %p95 = scmp.eq.s32.totalorder %s15, 0
      %p96 = por %p94, %p95
      %s97 = ssub.s32 %s16, %s28
      %p98 = scmp.eq.s32.totalorder %s97, 0
      %s100 = sadd.s32 %s99, 1
      %s101 = scalar_select %p98, %s99, %s100
      %p104 = pneg %p98
      %p105 = scmp.eq.s32.totalorder %s9, 2
      %p106 = por %p104, %p105
      %p107 = scmp.ne.s32.totalorder %s99, %s102
      %p108 = scmp.eq.s32.totalorder %s9, 0
      %p109 = por %p107, %p108
      %p110 = scmp.ne.s32.totalorder %s99, %s102
      %p111 = scmp.eq.s32.totalorder %s14, 2
      %p112 = por %p110, %p111
      %p113 = scmp.ne.s32.totalorder %s102, %s103
      %p114 = scmp.eq.s32.totalorder %s14, 0
      %p115 = por %p113, %p114
      %p116 = scmp.ne.s32.totalorder %s102, %s103
      %p117 = scmp.eq.s32.totalorder %s15, 2
      %p118 = por %p116, %p117
      %p120 = scmp.ne.s32.totalorder %s103, %s119
      %p121 = scmp.eq.s32.totalorder %s15, 0
      %p122 = por %p120, %p121
      %p123 = scmp.le.s32.totalorder 1, %s9
      %p124 = scmp.lt.s32.totalorder %s9, 4
      %p125 = pnand %p123, %p124
      %p126 = pneg %p125
      // Predicated region
      $region9: #{tpu_custom_call.1} parent=5 // pred_check
        _
      $region10: #{tpu_custom_call.1} parent=5 // pred_check_branch
        %128 = sbr.rel (%p125) target = $region12
      $region11: #{tpu_custom_call.1} parent=5 // pred_region
        %s129 = ssub.s32 %s9, 1
      $region12: #{tpu_custom_call.1} parent=5 // pred_fallthru
        _
      %p130 = scmp.lt.s32.totalorder %s9, 3
      // Predicated region
      $region13: #{tpu_custom_call.1} parent=5 // pred_check
        %p131 = pneg %p130
      $region14: #{tpu_custom_call.1} parent=5 // pred_check_branch
        %133 = sbr.rel (%p131) target = $region16
      $region15: #{tpu_custom_call.1} parent=5 // pred_region
        // Predicated region
        $region17: #{tpu_custom_call.1} parent=15 // pred_check
          %p134 = pneg %p49
        $region18: #{tpu_custom_call.1} parent=15 // pred_check_branch
          %136 = sbr.rel (%p134) target = $region20
        $region19: #{tpu_custom_call.1} parent=15 // pred_region
          %s137 = smul.u32 %s16, 3
          %s138 = sadd.s32 %s137, %s17
          %p139 = scmp.lt.s32.totalorder %s138, 2
          %s140 = scalar_select %p139, %s138, 2
          %s141 = smul.u32 16, %s140
          %p142 = scmp.lt.s32.totalorder %s141, 47
          %s143 = scalar_select %p142, %s141, 47
          %s144 = smul.addr %s143, 8
          %s145 = scalar_lea.vmem %s0, %s144
          %s146 = smul.u32 %s16, 3
          %s147 = sadd.s32 %s146, %s17
          %p148 = scmp.lt.s32.totalorder %s147, 2
          %s149 = scalar_select %p148, %s147, 2
          %s150 = smul.u32 16, %s149
        $region20: #{tpu_custom_call.1} parent=15 // pred_fallthru
          _
        // Predicated region
        $region21: #{tpu_custom_call.1} parent=15 // pred_check
          %p151 = pneg %p83
        $region22: #{tpu_custom_call.1} parent=15 // pred_check_branch
          %153 = sbr.rel (%p151) target = $region24
        $region23: #{tpu_custom_call.1} parent=15 // pred_region
          %s154 = smul.u32 %s16, 3
          %s155 = sadd.s32 %s154, %s17
          %p156 = scmp.lt.s32.totalorder %s155, 2
          %s157 = scalar_select %p156, %s155, 2
          %p158 = scmp.lt.s32.totalorder %s157, 2
          %s159 = scalar_select %p158, %s157, 2
          %s160 = scalar_lea.vmem %s1, %s159
          %s161 = smul.u32 %s16, 3
          %s162 = sadd.s32 %s161, %s17
          %p163 = scmp.lt.s32.totalorder %s162, 2
          %s164 = scalar_select %p163, %s162, 2
        $region24: #{tpu_custom_call.1} parent=15 // pred_fallthru
          _
      $region16: #{tpu_custom_call.1} parent=5 // pred_fallthru
        _
      %p165 = scmp.le.s32.totalorder 1, %s9
      %p166 = scmp.lt.s32.totalorder %s9, 4
      %p167 = pnand %p165, %p166
      %p168 = pneg %p167
      // Predicated region
      $region25: #{tpu_custom_call.1} parent=5 // pred_check
        _
      $region26: #{tpu_custom_call.1} parent=5 // pred_check_branch
        %170 = sbr.rel (%p167) target = $region28
      $region27: #{tpu_custom_call.1} parent=5 // pred_region
        %s171 = ssub.s32 %s9, 1
        %s172 = smul.u32 %s18, 3
        %s173 = sadd.s32 %s172, %s19
        %p174 = scmp.lt.s32.totalorder %s173, 2
        %s175 = scalar_select %p174, %s173, 2
        %s176 = smul.u32 16, %s175
        %p177 = scmp.lt.s32.totalorder %s176, 47
        %s178 = scalar_select %p177, %s176, 47
        %s179 = smul.addr %s178, 8
        %s180 = scalar_lea.vmem %s0, %s179
        %p181 = pneg %p55
        %p182 = pneg %p52
        %s183 = smul.u32 %s18, 3
        %s184 = sadd.s32 %s183, %s19
        %p185 = scmp.lt.s32.totalorder %s184, 2
        %s186 = scalar_select %p185, %s184, 2
        %p187 = scmp.lt.s32.totalorder %s186, 2
        %s188 = scalar_select %p187, %s186, 2
        %s189 = scalar_lea.vmem %s1, %s188
        %p190 = pneg %p89
        %p191 = pneg %p86
        %p192 = pneg %p115
        %p193 = pneg %p112
        %s194 = smul.u32 %s18, 3
        %s195 = sadd.s32 %s194, %s19
        %p196 = scmp.lt.s32.totalorder %s195, 2
        %s197 = scalar_select %p196, %s195, 2
        %s198 = smul.u32 16, %s197
        %p199 = scmp.lt.s32.totalorder %s198, 47
        %s200 = scalar_select %p199, %s198, 47
        %s201 = smul.addr %s200, 8
        %s202 = scalar_lea.vmem %s0, %s201
        %s203 = smul.u32 %s18, 3
        %s204 = sadd.s32 %s203, %s19
        %p205 = scmp.lt.s32.totalorder %s204, 2
        %s206 = scalar_select %p205, %s204, 2
        %s207 = smul.u32 16, %s206
        %s208 = smul.u32 %s18, 3
        %s209 = sadd.s32 %s208, %s19
        %p210 = scmp.lt.s32.totalorder %s209, 2
        %s211 = scalar_select %p210, %s209, 2
        %p212 = scmp.lt.s32.totalorder %s211, 2
        %s213 = scalar_select %p212, %s211, 2
        %s214 = scalar_lea.vmem %s1, %s213
        %s215 = smul.u32 %s18, 3
        %s216 = sadd.s32 %s215, %s19
        %p217 = scmp.lt.s32.totalorder %s216, 2
        %s218 = scalar_select %p217, %s216, 2
        %p219 = scmp.eq.s32.totalorder %s19, 0
        // Predicated region
        $region29: #{tpu_custom_call.1} parent=27 // pred_check
          %p220 = pneg %p219
        $region30: #{tpu_custom_call.1} parent=27 // pred_check_branch
          %222 = sbr.rel (%p220) target = $region32
        $region31: #{tpu_custom_call.1} parent=27 // pred_region
          %vm223 = vcmask 0
          %224 = vst.msk [vmem:[#allocation2] sm:$0x1] %vm223, 0.0
        $region32: #{tpu_custom_call.1} parent=27 // pred_fallthru
          _
        %s225 = smul.u32 %s18, 3
        %s226 = sadd.s32 %s225, %s19
        %s227 = smul.u32 %s226, 128
        %s228 = ssub.s32 384, %s227
        %v229 = vld [vmem:[%s202] sm:$0xff]
        %v230 = vld [vmem:[%s202 + $0x8] sm:$0xff]
        %v231 = vld [vmem:[%s202 + $0x10] sm:$0xff]
        %v232 = vld [vmem:[%s202 + $0x18] sm:$0xff]
        %v233 = vld [vmem:[%s202 + $0x20] sm:$0xff]
        %v234 = vld [vmem:[%s202 + $0x28] sm:$0xff]
        %v235 = vld [vmem:[%s202 + $0x30] sm:$0xff]
        %v236 = vld [vmem:[%s202 + $0x38] sm:$0xff]
        %v237 = vld [vmem:[%s202 + $0x40] sm:$0xff]
        %v238 = vld [vmem:[%s202 + $0x48] sm:$0xff]
        %v239 = vld [vmem:[%s202 + $0x50] sm:$0xff]
        %v240 = vld [vmem:[%s202 + $0x58] sm:$0xff]
        %v241 = vld [vmem:[%s202 + $0x60] sm:$0xff]
        %v242 = vld [vmem:[%s202 + $0x68] sm:$0xff]
        %v243 = vld [vmem:[%s202 + $0x70] sm:$0xff]
        %v244 = vld [vmem:[%s202 + $0x78] sm:$0xff]
        %v245 = vlaneseq
        %v246 = vshrl.u32 %v245, 7
        %v247 = vadd.s32 %v246, 8
        %v248 = vadd.s32 %v246, 16
        %v249 = vadd.s32 %v246, 24
        %v250 = vadd.s32 %v246, 32
        %v251 = vadd.s32 %v246, 40
        %v252 = vadd.s32 %v246, 48
        %v253 = vadd.s32 %v246, 56
        %v254 = vadd.s32 %v246, 64
        %v255 = vadd.s32 %v246, 72
        %v256 = vadd.s32 %v246, 80
        %v257 = vadd.s32 %v246, 88
        %v258 = vadd.s32 %v246, 96
        %v259 = vadd.s32 %v246, 104
        %v260 = vadd.s32 %v246, 112
        %v261 = vadd.s32 %v246, 120
        %v262 = vstv %s228
        %vm263 = vcmp.lt.s32.totalorder %v246, %v262
        %vm264 = vcmp.lt.s32.totalorder %v247, %v262
        %vm265 = vcmp.lt.s32.totalorder %v248, %v262
        %vm266 = vcmp.lt.s32.totalorder %v249, %v262
        %vm267 = vcmp.lt.s32.totalorder %v250, %v262
        %vm268 = vcmp.lt.s32.totalorder %v251, %v262
        %vm269 = vcmp.lt.s32.totalorder %v252, %v262
        %vm270 = vcmp.lt.s32.totalorder %v253, %v262
        %vm271 = vcmp.lt.s32.totalorder %v254, %v262
        %vm272 = vcmp.lt.s32.totalorder %v255, %v262
        %vm273 = vcmp.lt.s32.totalorder %v256, %v262
        %vm274 = vcmp.lt.s32.totalorder %v257, %v262
        %vm275 = vcmp.lt.s32.totalorder %v258, %v262
        %vm276 = vcmp.lt.s32.totalorder %v259, %v262
        %vm277 = vcmp.lt.s32.totalorder %v260, %v262
        %vm278 = vcmp.lt.s32.totalorder %v261, %v262
        %v279 = vsel %vm263, 1, 0
        %v280 = vsel %vm264, 1, 0
        %v281 = vsel %vm265, 1, 0
        %v282 = vsel %vm266, 1, 0
        %v283 = vsel %vm267, 1, 0
        %v284 = vsel %vm268, 1, 0
        %v285 = vsel %vm269, 1, 0
        %v286 = vsel %vm270, 1, 0
        %v287 = vsel %vm271, 1, 0
        %v288 = vsel %vm272, 1, 0
        %v289 = vsel %vm273, 1, 0
        %v290 = vsel %vm274, 1, 0
        %v291 = vsel %vm275, 1, 0
        %v292 = vsel %vm276, 1, 0
        %v293 = vsel %vm277, 1, 0
        %v294 = vsel %vm278, 1, 0
        %vm295 = vcmp.eq.s32.totalorder %v279, 1
        %vm296 = vcmp.eq.s32.totalorder %v280, 1
        %vm297 = vcmp.eq.s32.totalorder %v281, 1
        %vm298 = vcmp.eq.s32.totalorder %v282, 1
        %vm299 = vcmp.eq.s32.totalorder %v283, 1
        %vm300 = vcmp.eq.s32.totalorder %v284, 1
        %vm301 = vcmp.eq.s32.totalorder %v285, 1
        %vm302 = vcmp.eq.s32.totalorder %v286, 1
        %vm303 = vcmp.eq.s32.totalorder %v287, 1
        %vm304 = vcmp.eq.s32.totalorder %v288, 1
        %vm305 = vcmp.eq.s32.totalorder %v289, 1
        %vm306 = vcmp.eq.s32.totalorder %v290, 1
        %vm307 = vcmp.eq.s32.totalorder %v291, 1
        %vm308 = vcmp.eq.s32.totalorder %v292, 1
        %vm309 = vcmp.eq.s32.totalorder %v293, 1
        %vm310 = vcmp.eq.s32.totalorder %v294, 1
        %v311 = vsel %vm295, %v229, 0.0
        %v312 = vsel %vm296, %v230, 0.0
        %v313 = vsel %vm297, %v231, 0.0
        %v314 = vsel %vm298, %v232, 0.0
        %v315 = vsel %vm299, %v233, 0.0
        %v316 = vsel %vm300, %v234, 0.0
        %v317 = vsel %vm301, %v235, 0.0
        %v318 = vsel %vm302, %v236, 0.0
        %v319 = vsel %vm303, %v237, 0.0
        %v320 = vsel %vm304, %v238, 0.0
        %v321 = vsel %vm305, %v239, 0.0
        %v322 = vsel %vm306, %v240, 0.0
        %v323 = vsel %vm307, %v241, 0.0
        %v324 = vsel %vm308, %v242, 0.0
        %v325 = vsel %vm309, %v243, 0.0
        %v326 = vsel %vm310, %v244, 0.0
        %vm327 = vcmask 261120
        %v328 = vsel %vm327, %v311, -inf
        %329 = vmax.xlane.f32.xlu0 %v328
        %v330 = vpop.xlane.xlu0 %329
        %v331 = vsel %vm327, %v312, -inf
        %332 = vmax.xlane.f32.xlu0 %v331
        %v333 = vpop.xlane.xlu0 %332
        %v334 = vsel %vm327, %v313, -inf
        %335 = vmax.xlane.f32.xlu0 %v334
        %v336 = vpop.xlane.xlu0 %335
        %v337 = vsel %vm327, %v314, -inf
        %338 = vmax.xlane.f32.xlu0 %v337
        %v339 = vpop.xlane.xlu0 %338
        %v340 = vsel %vm327, %v315, -inf
        %341 = vmax.xlane.f32.xlu0 %v340
        %v342 = vpop.xlane.xlu0 %341
        %v343 = vsel %vm327, %v316, -inf
        %344 = vmax.xlane.f32.xlu0 %v343
        %v345 = vpop.xlane.xlu0 %344
        %v346 = vsel %vm327, %v317, -inf
        %347 = vmax.xlane.f32.xlu0 %v346
        %v348 = vpop.xlane.xlu0 %347
        %v349 = vsel %vm327, %v318, -inf
        %350 = vmax.xlane.f32.xlu0 %v349
        %v351 = vpop.xlane.xlu0 %350
        %v352 = vsel %vm327, %v319, -inf
        %353 = vmax.xlane.f32.xlu0 %v352
        %v354 = vpop.xlane.xlu0 %353
        %v355 = vsel %vm327, %v320, -inf
        %356 = vmax.xlane.f32.xlu0 %v355
        %v357 = vpop.xlane.xlu0 %356
        %v358 = vsel %vm327, %v321, -inf
        %359 = vmax.xlane.f32.xlu0 %v358
        %v360 = vpop.xlane.xlu0 %359
        %v361 = vsel %vm327, %v322, -inf
        %362 = vmax.xlane.f32.xlu0 %v361
        %v363 = vpop.xlane.xlu0 %362
        %v364 = vsel %vm327, %v323, -inf
        %365 = vmax.xlane.f32.xlu0 %v364
        %v366 = vpop.xlane.xlu0 %365
        %v367 = vsel %vm327, %v324, -inf
        %368 = vmax.xlane.f32.xlu0 %v367
        %v369 = vpop.xlane.xlu0 %368
        %v370 = vsel %vm327, %v325, -inf
        %371 = vmax.xlane.f32.xlu0 %v370
        %v372 = vpop.xlane.xlu0 %371
        %v373 = vsel %vm327, %v326, -inf
        %374 = vmax.xlane.f32.xlu0 %v373
        %v375 = vpop.xlane.xlu0 %374
        %v376 = vsub.f32 %v311, %v330
        %v377 = vsub.f32 %v312, %v333
        %v378 = vsub.f32 %v313, %v336
        %v379 = vsub.f32 %v314, %v339
        %v380 = vsub.f32 %v315, %v342
        %v381 = vsub.f32 %v316, %v345
        %v382 = vsub.f32 %v317, %v348
        %v383 = vsub.f32 %v318, %v351
        %v384 = vsub.f32 %v319, %v354
        %v385 = vsub.f32 %v320, %v357
        %v386 = vsub.f32 %v321, %v360
        %v387 = vsub.f32 %v322, %v363
        %v388 = vsub.f32 %v323, %v366
        %v389 = vsub.f32 %v324, %v369
        %v390 = vsub.f32 %v325, %v372
        %v391 = vsub.f32 %v326, %v375
        %v392 = vmul.f32 %v376, 1.442695
        %v393 = vpow.pop %v392
        %v394 = vmul.f32 %v377, 1.442695
        %v395 = vpow.pop %v394
        %v396 = vmul.f32 %v378, 1.442695
        %v397 = vpow.pop %v396
        %v398 = vmul.f32 %v379, 1.442695
        %v399 = vpow.pop %v398
        %v400 = vmul.f32 %v380, 1.442695
        %v401 = vpow.pop %v400
        %v402 = vmul.f32 %v381, 1.442695
        %v403 = vpow.pop %v402
        %v404 = vmul.f32 %v382, 1.442695
        %v405 = vpow.pop %v404
        %v406 = vmul.f32 %v383, 1.442695
        %v407 = vpow.pop %v406
        %v408 = vmul.f32 %v384, 1.442695
        %v409 = vpow.pop %v408
        %v410 = vmul.f32 %v385, 1.442695
        %v411 = vpow.pop %v410
        %v412 = vmul.f32 %v386, 1.442695
        %v413 = vpow.pop %v412
        %v414 = vmul.f32 %v387, 1.442695
        %v415 = vpow.pop %v414
        %v416 = vmul.f32 %v388, 1.442695
        %v417 = vpow.pop %v416
        %v418 = vmul.f32 %v389, 1.442695
        %v419 = vpow.pop %v418
        %v420 = vmul.f32 %v390, 1.442695
        %v421 = vpow.pop %v420
        %v422 = vmul.f32 %v391, 1.442695
        %v423 = vpow.pop %v422
        %v424 = vsel %vm327, %v393, 0.0
        %425 = vadd.xlane.f32.xlu0 %v424
        %v426 = vpop.xlane.xlu0 %425
        %v427 = vsel %vm327, %v395, 0.0
        %428 = vadd.xlane.f32.xlu0 %v427
        %v429 = vpop.xlane.xlu0 %428
        %v430 = vsel %vm327, %v397, 0.0
        %431 = vadd.xlane.f32.xlu0 %v430
        %v432 = vpop.xlane.xlu0 %431
        %v433 = vsel %vm327, %v399, 0.0
        %434 = vadd.xlane.f32.xlu0 %v433
        %v435 = vpop.xlane.xlu0 %434
        %v436 = vsel %vm327, %v401, 0.0
        %437 = vadd.xlane.f32.xlu0 %v436
        %v438 = vpop.xlane.xlu0 %437
        %v439 = vsel %vm327, %v403, 0.0
        %440 = vadd.xlane.f32.xlu0 %v439
        %v441 = vpop.xlane.xlu0 %440
        %v442 = vsel %vm327, %v405, 0.0
        %443 = vadd.xlane.f32.xlu0 %v442
        %v444 = vpop.xlane.xlu0 %443
        %v445 = vsel %vm327, %v407, 0.0
        %446 = vadd.xlane.f32.xlu0 %v445
        %v447 = vpop.xlane.xlu0 %446
        %v448 = vsel %vm327, %v409, 0.0
        %449 = vadd.xlane.f32.xlu0 %v448
        %v450 = vpop.xlane.xlu0 %449
        %v451 = vsel %vm327, %v411, 0.0
        %452 = vadd.xlane.f32.xlu0 %v451
        %v453 = vpop.xlane.xlu0 %452
        %v454 = vsel %vm327, %v413, 0.0
        %455 = vadd.xlane.f32.xlu0 %v454
        %v456 = vpop.xlane.xlu0 %455
        %v457 = vsel %vm327, %v415, 0.0
        %458 = vadd.xlane.f32.xlu0 %v457
        %v459 = vpop.xlane.xlu0 %458
        %v460 = vsel %vm327, %v417, 0.0
        %461 = vadd.xlane.f32.xlu0 %v460
        %v462 = vpop.xlane.xlu0 %461
        %v463 = vsel %vm327, %v419, 0.0
        %464 = vadd.xlane.f32.xlu0 %v463
        %v465 = vpop.xlane.xlu0 %464
        %v466 = vsel %vm327, %v421, 0.0
        %467 = vadd.xlane.f32.xlu0 %v466
        %v468 = vpop.xlane.xlu0 %467
        %v469 = vsel %vm327, %v423, 0.0
        %470 = vadd.xlane.f32.xlu0 %v469
        %v471 = vpop.xlane.xlu0 %470
        %v472 = vlog2.pop %v426
        %v473 = vmul.f32 %v472, 0.6931472
        %v474 = vlog2.pop %v429
        %v475 = vmul.f32 %v474, 0.6931472
        %v476 = vlog2.pop %v432
        %v477 = vmul.f32 %v476, 0.6931472
        %v478 = vlog2.pop %v435
        %v479 = vmul.f32 %v478, 0.6931472
        %v480 = vlog2.pop %v438
        %v481 = vmul.f32 %v480, 0.6931472
        %v482 = vlog2.pop %v441
        %v483 = vmul.f32 %v482, 0.6931472
        %v484 = vlog2.pop %v444
        %v485 = vmul.f32 %v484, 0.6931472
        %v486 = vlog2.pop %v447
        %v487 = vmul.f32 %v486, 0.6931472
        %v488 = vlog2.pop %v450
        %v489 = vmul.f32 %v488, 0.6931472
        %v490 = vlog2.pop %v453
        %v491 = vmul.f32 %v490, 0.6931472
        %v492 = vlog2.pop %v456
        %v493 = vmul.f32 %v492, 0.6931472
        %v494 = vlog2.pop %v459
        %v495 = vmul.f32 %v494, 0.6931472
        %v496 = vlog2.pop %v462
        %v497 = vmul.f32 %v496, 0.6931472
        %v498 = vlog2.pop %v465
        %v499 = vmul.f32 %v498, 0.6931472
        %v500 = vlog2.pop %v468
        %v501 = vmul.f32 %v500, 0.6931472
        %v502 = vlog2.pop %v471
        %v503 = vmul.f32 %v502, 0.6931472
        %v504 = vadd.f32 %v330, %v473
        %v505 = vadd.f32 %v333, %v475
        %v506 = vadd.f32 %v336, %v477
        %v507 = vadd.f32 %v339, %v479
        %v508 = vadd.f32 %v342, %v481
        %v509 = vadd.f32 %v345, %v483
        %v510 = vadd.f32 %v348, %v485
        %v511 = vadd.f32 %v351, %v487
        %v512 = vadd.f32 %v354, %v489
        %v513 = vadd.f32 %v357, %v491
        %v514 = vadd.f32 %v360, %v493
        %v515 = vadd.f32 %v363, %v495
        %v516 = vadd.f32 %v366, %v497
        %v517 = vadd.f32 %v369, %v499
        %v518 = vadd.f32 %v372, %v501
        %v519 = vadd.f32 %v375, %v503
        %v520 = vlaneseq
        %v521 = vand.u32 %v520, 127
        %vm522 = vcmp.lt.s32.totalorder %v521, %v262
        %v523 = vsel %vm522, 1, 0
        %v524 = vcvt.s32.f32 %v523
        %525 = vmatprep.subr.mxu0 0.0
        %v526 = vand.u32 %v504, 4294901760
        %527 = vmatpush1.msra.mxu0 %v526
        %528 = vmatprep.subr.mxu0 0.0
        %v529 = vand.u32 %v505, 4294901760
        %530 = vmatpush1.msra.mxu0 %v529
        %531 = vmatprep.subr.mxu0 0.0
        %v532 = vand.u32 %v506, 4294901760
        %533 = vmatpush1.msra.mxu0 %v532
        %534 = vmatprep.subr.mxu0 0.0
        %v535 = vand.u32 %v507, 4294901760
        %536 = vmatpush1.msra.mxu0 %v535
        %537 = vmatprep.subr.mxu0 0.0
        %v538 = vand.u32 %v508, 4294901760
        %539 = vmatpush1.msra.mxu0 %v538
        %540 = vmatprep.subr.mxu0 0.0
        %v541 = vand.u32 %v509, 4294901760
        %542 = vmatpush1.msra.mxu0 %v541
        %543 = vmatprep.subr.mxu0 0.0
        %v544 = vand.u32 %v510, 4294901760
        %545 = vmatpush1.msra.mxu0 %v544
        %546 = vmatprep.subr.mxu0 0.0
        %v547 = vand.u32 %v511, 4294901760
        %548 = vmatpush1.msra.mxu0 %v547
        %549 = vmatprep.subr.mxu0 0.0
        %v550 = vand.u32 %v512, 4294901760
        %551 = vmatpush1.msra.mxu0 %v550
        %552 = vmatprep.subr.mxu0 0.0
        %v553 = vand.u32 %v513, 4294901760
        %554 = vmatpush1.msra.mxu0 %v553
        %555 = vmatprep.subr.mxu0 0.0
        %v556 = vand.u32 %v514, 4294901760
        %557 = vmatpush1.msra.mxu0 %v556
        %558 = vmatprep.subr.mxu0 0.0
        %v559 = vand.u32 %v515, 4294901760
        %560 = vmatpush1.msra.mxu0 %v559
        %561 = vmatprep.subr.mxu0 0.0
        %v562 = vand.u32 %v516, 4294901760
        %563 = vmatpush1.msra.mxu0 %v562
        %564 = vmatprep.subr.mxu0 0.0
        %v565 = vand.u32 %v517, 4294901760
        %566 = vmatpush1.msra.mxu0 %v565
        %567 = vmatprep.subr.mxu0 0.0
        %v568 = vand.u32 %v518, 4294901760
        %569 = vmatpush1.msra.mxu0 %v568
        %570 = vmatprep.subr.mxu0 0.0
        %v571 = vand.u32 %v519, 4294901760
        %572 = vmatpush1.msra.mxu0 %v571
        %573 = vmatprep.subr.mxu0 0.0
        %574 = vmatpush1.msra.mxu0 0.0
        %575 = vmatprep.subr.mxu0 0.0
        %576 = vmatpush1.msra.mxu0 0.0
        %577 = vmatprep.subr.mxu0 0.0
        %578 = vmatpush1.msra.mxu0 0.0
        %579 = vmatprep.subr.mxu0 0.0
        %580 = vmatpush1.msra.mxu0 0.0
        %581 = vmatprep.subr.mxu0 0.0
        %582 = vmatpush1.msra.mxu0 0.0
        %583 = vmatprep.subr.mxu0 0.0
        %584 = vmatpush1.msra.mxu0 0.0
        %585 = vmatprep.subr.mxu0 0.0
        %586 = vmatpush1.msra.mxu0 0.0
        %587 = vmatprep.subr.mxu0 0.0
        %588 = vmatpush1.msra.mxu0 0.0
        %589 = vmatprep.subr.mxu0 0.0
        %590 = vmatpush1.msra.mxu0 0.0
        %591 = vmatprep.subr.mxu0 0.0
        %592 = vmatpush1.msra.mxu0 0.0
        %593 = vmatprep.subr.mxu0 0.0
        %594 = vmatpush1.msra.mxu0 0.0
        %595 = vmatprep.subr.mxu0 0.0
        %596 = vmatpush1.msra.mxu0 0.0
        %597 = vmatprep.subr.mxu0 0.0
        %598 = vmatpush1.msra.mxu0 0.0
        %599 = vmatprep.subr.mxu0 0.0
        %600 = vmatpush1.msra.mxu0 0.0
        %601 = vmatprep.subr.mxu0 0.0
        %602 = vmatpush1.msra.mxu0 0.0
        %603 = vmatprep.subr.mxu0 0.0
        %604 = vmatpush1.msra.mxu0 0.0
        %605 = vmatprep.mubr.f32.mxu0 0.0
        %v606 = vand.u32 %v524, 4294901760
        %v607 = vsub.f32 %v524, %v606
        %v608 = vand.u32 %v607, 4294901760
        %v609 = vsub.f32 %v607, %v608
        %v610 = vand.u32 %v609, 4294901760
        %611 = vmatmul.mubr.f32.gmra.mrb[0].mxu0 %v610
        %v612 = vpop.f32.mrb[0].mxu0
        %v613 = vadd.f32 0.0, %v612
        %v614 = vpop.f32.mrb[0].mxu0
        %615 = vdwg.mxu0
        %616 = vmatprep.subr.mxu0 0.0
        %v617 = vand.u32 %v504, 4294901760
        %v618 = vsub.f32 %v504, %v617
        %v619 = vand.u32 %v618, 4294901760
        %v620 = vsub.f32 %v618, %v619
        %v621 = vand.u32 %v620, 4294901760
        %622 = vmatpush1.msra.mxu0 %v621
        %623 = vmatprep.subr.mxu0 0.0
        %v624 = vand.u32 %v505, 4294901760
        %v625 = vsub.f32 %v505, %v624
        %v626 = vand.u32 %v625, 4294901760
        %v627 = vsub.f32 %v625, %v626
        %v628 = vand.u32 %v627, 4294901760
        %629 = vmatpush1.msra.mxu0 %v628
        %630 = vmatprep.subr.mxu0 0.0
        %v631 = vand.u32 %v506, 4294901760
        %v632 = vsub.f32 %v506, %v631
        %v633 = vand.u32 %v632, 4294901760
        %v634 = vsub.f32 %v632, %v633
        %v635 = vand.u32 %v634, 4294901760
        %636 = vmatpush1.msra.mxu0 %v635
        %637 = vmatprep.subr.mxu0 0.0
        %v638 = vand.u32 %v507, 4294901760
        %v639 = vsub.f32 %v507, %v638
        %v640 = vand.u32 %v639, 4294901760
        %v641 = vsub.f32 %v639, %v640
        %v642 = vand.u32 %v641, 4294901760
        %643 = vmatpush1.msra.mxu0 %v642
        %644 = vmatprep.subr.mxu0 0.0
        %v645 = vand.u32 %v508, 4294901760
        %v646 = vsub.f32 %v508, %v645
        %v647 = vand.u32 %v646, 4294901760
        %v648 = vsub.f32 %v646, %v647
        %v649 = vand.u32 %v648, 4294901760
        %650 = vmatpush1.msra.mxu0 %v649
        %651 = vmatprep.subr.mxu0 0.0
        %v652 = vand.u32 %v509, 4294901760
        %v653 = vsub.f32 %v509, %v652
        %v654 = vand.u32 %v653, 4294901760
        %v655 = vsub.f32 %v653, %v654
        %v656 = vand.u32 %v655, 4294901760
        %657 = vmatpush1.msra.mxu0 %v656
        %658 = vmatprep.subr.mxu0 0.0
        %v659 = vand.u32 %v510, 4294901760
        %v660 = vsub.f32 %v510, %v659
        %v661 = vand.u32 %v660, 4294901760
        %v662 = vsub.f32 %v660, %v661
        %v663 = vand.u32 %v662, 4294901760
        %664 = vmatpush1.msra.mxu0 %v663
        %665 = vmatprep.subr.mxu0 0.0
        %v666 = vand.u32 %v511, 4294901760
        %v667 = vsub.f32 %v511, %v666
        %v668 = vand.u32 %v667, 4294901760
        %v669 = vsub.f32 %v667, %v668
        %v670 = vand.u32 %v669, 4294901760
        %671 = vmatpush1.msra.mxu0 %v670
        %672 = vmatprep.subr.mxu0 0.0
        %v673 = vand.u32 %v512, 4294901760
        %v674 = vsub.f32 %v512, %v673
        %v675 = vand.u32 %v674, 4294901760
        %v676 = vsub.f32 %v674, %v675
        %v677 = vand.u32 %v676, 4294901760
        %678 = vmatpush1.msra.mxu0 %v677
        %679 = vmatprep.subr.mxu0 0.0
        %v680 = vand.u32 %v513, 4294901760
        %v681 = vsub.f32 %v513, %v680
        %v682 = vand.u32 %v681, 4294901760
        %v683 = vsub.f32 %v681, %v682
        %v684 = vand.u32 %v683, 4294901760
        %685 = vmatpush1.msra.mxu0 %v684
        %686 = vmatprep.subr.mxu0 0.0
        %v687 = vand.u32 %v514, 4294901760
        %v688 = vsub.f32 %v514, %v687
        %v689 = vand.u32 %v688, 4294901760
        %v690 = vsub.f32 %v688, %v689
        %v691 = vand.u32 %v690, 4294901760
        %692 = vmatpush1.msra.mxu0 %v691
        %693 = vmatprep.subr.mxu0 0.0
        %v694 = vand.u32 %v515, 4294901760
        %v695 = vsub.f32 %v515, %v694
        %v696 = vand.u32 %v695, 4294901760
        %v697 = vsub.f32 %v695, %v696
        %v698 = vand.u32 %v697, 4294901760
        %699 = vmatpush1.msra.mxu0 %v698
        %700 = vmatprep.subr.mxu0 0.0
        %v701 = vand.u32 %v516, 4294901760
        %v702 = vsub.f32 %v516, %v701
        %v703 = vand.u32 %v702, 4294901760
        %v704 = vsub.f32 %v702, %v703
        %v705 = vand.u32 %v704, 4294901760
        %706 = vmatpush1.msra.mxu0 %v705
        %707 = vmatprep.subr.mxu0 0.0
        %v708 = vand.u32 %v517, 4294901760
        %v709 = vsub.f32 %v517, %v708
        %v710 = vand.u32 %v709, 4294901760
        %v711 = vsub.f32 %v709, %v710
        %v712 = vand.u32 %v711, 4294901760
        %713 = vmatpush1.msra.mxu0 %v712
        %714 = vmatprep.subr.mxu0 0.0
        %v715 = vand.u32 %v518, 4294901760
        %v716 = vsub.f32 %v518, %v715
        %v717 = vand.u32 %v716, 4294901760
        %v718 = vsub.f32 %v716, %v717
        %v719 = vand.u32 %v718, 4294901760
        %720 = vmatpush1.msra.mxu0 %v719
        %721 = vmatprep.subr.mxu0 0.0
        %v722 = vand.u32 %v519, 4294901760
        %v723 = vsub.f32 %v519, %v722
        %v724 = vand.u32 %v723, 4294901760
        %v725 = vsub.f32 %v723, %v724
        %v726 = vand.u32 %v725, 4294901760
        %727 = vmatpush1.msra.mxu0 %v726
        %728 = vmatprep.subr.mxu0 0.0
        %729 = vmatpush1.msra.mxu0 0.0
        %730 = vmatprep.subr.mxu0 0.0
        %731 = vmatpush1.msra.mxu0 0.0
        %732 = vmatprep.subr.mxu0 0.0
        %733 = vmatpush1.msra.mxu0 0.0
        %734 = vmatprep.subr.mxu0 0.0
        %735 = vmatpush1.msra.mxu0 0.0
        %736 = vmatprep.subr.mxu0 0.0
        %737 = vmatpush1.msra.mxu0 0.0
        %738 = vmatprep.subr.mxu0 0.0
        %739 = vmatpush1.msra.mxu0 0.0
        %740 = vmatprep.subr.mxu0 0.0
        %741 = vmatpush1.msra.mxu0 0.0
        %742 = vmatprep.subr.mxu0 0.0
        %743 = vmatpush1.msra.mxu0 0.0
        %744 = vmatprep.subr.mxu0 0.0
        %745 = vmatpush1.msra.mxu0 0.0
        %746 = vmatprep.subr.mxu0 0.0
        %747 = vmatpush1.msra.mxu0 0.0
        %748 = vmatprep.subr.mxu0 0.0
        %749 = vmatpush1.msra.mxu0 0.0
        %750 = vmatprep.subr.mxu0 0.0
        %751 = vmatpush1.msra.mxu0 0.0
        %752 = vmatprep.subr.mxu0 0.0
        %753 = vmatpush1.msra.mxu0 0.0
        %754 = vmatprep.subr.mxu0 0.0
        %755 = vmatpush1.msra.mxu0 0.0
        %756 = vmatprep.subr.mxu0 0.0
        %757 = vmatpush1.msra.mxu0 0.0
        %758 = vmatprep.subr.mxu0 0.0
        %759 = vmatpush1.msra.mxu0 0.0
        %760 = vmatprep.mubr.f32.mxu0 0.0
        %v761 = vand.u32 %v524, 4294901760
        %762 = vmatmul.mubr.f32.gmra.mrb[0].mxu0 %v761
        %v763 = vpop.f32.mrb[0].mxu0
        %v764 = vadd.f32 %v613, %v763
        %v765 = vpop.f32.mrb[0].mxu0
        %766 = vdwg.mxu0
        %767 = vmatprep.subr.mxu0 0.0
        %v768 = vand.u32 %v504, 4294901760
        %v769 = vsub.f32 %v504, %v768
        %770 = vmatpush1.msra.mxu0 %v769
        %771 = vmatprep.subr.mxu0 0.0
        %v772 = vand.u32 %v505, 4294901760
        %v773 = vsub.f32 %v505, %v772
        %774 = vmatpush1.msra.mxu0 %v773
        %775 = vmatprep.subr.mxu0 0.0
        %v776 = vand.u32 %v506, 4294901760
        %v777 = vsub.f32 %v506, %v776
        %778 = vmatpush1.msra.mxu0 %v777
        %779 = vmatprep.subr.mxu0 0.0
        %v780 = vand.u32 %v507, 4294901760
        %v781 = vsub.f32 %v507, %v780
        %782 = vmatpush1.msra.mxu0 %v781
        %783 = vmatprep.subr.mxu0 0.0
        %v784 = vand.u32 %v508, 4294901760
        %v785 = vsub.f32 %v508, %v784
        %786 = vmatpush1.msra.mxu0 %v785
        %787 = vmatprep.subr.mxu0 0.0
        %v788 = vand.u32 %v509, 4294901760
        %v789 = vsub.f32 %v509, %v788
        %790 = vmatpush1.msra.mxu0 %v789
        %791 = vmatprep.subr.mxu0 0.0
        %v792 = vand.u32 %v510, 4294901760
        %v793 = vsub.f32 %v510, %v792
        %794 = vmatpush1.msra.mxu0 %v793
        %795 = vmatprep.subr.mxu0 0.0
        %v796 = vand.u32 %v511, 4294901760
        %v797 = vsub.f32 %v511, %v796
        %798 = vmatpush1.msra.mxu0 %v797
        %799 = vmatprep.subr.mxu0 0.0
        %v800 = vand.u32 %v512, 4294901760
        %v801 = vsub.f32 %v512, %v800
        %802 = vmatpush1.msra.mxu0 %v801
        %803 = vmatprep.subr.mxu0 0.0
        %v804 = vand.u32 %v513, 4294901760
        %v805 = vsub.f32 %v513, %v804
        %806 = vmatpush1.msra.mxu0 %v805
        %807 = vmatprep.subr.mxu0 0.0
        %v808 = vand.u32 %v514, 4294901760
        %v809 = vsub.f32 %v514, %v808
        %810 = vmatpush1.msra.mxu0 %v809
        %811 = vmatprep.subr.mxu0 0.0
        %v812 = vand.u32 %v515, 4294901760
        %v813 = vsub.f32 %v515, %v812
        %814 = vmatpush1.msra.mxu0 %v813
        %815 = vmatprep.subr.mxu0 0.0
        %v816 = vand.u32 %v516, 4294901760
        %v817 = vsub.f32 %v516, %v816
        %818 = vmatpush1.msra.mxu0 %v817
        %819 = vmatprep.subr.mxu0 0.0
        %v820 = vand.u32 %v517, 4294901760
        %v821 = vsub.f32 %v517, %v820
        %822 = vmatpush1.msra.mxu0 %v821
        %823 = vmatprep.subr.mxu0 0.0
        %v824 = vand.u32 %v518, 4294901760
        %v825 = vsub.f32 %v518, %v824
        %826 = vmatpush1.msra.mxu0 %v825
        %827 = vmatprep.subr.mxu0 0.0
        %v828 = vand.u32 %v519, 4294901760
        %v829 = vsub.f32 %v519, %v828
        %830 = vmatpush1.msra.mxu0 %v829
        %831 = vmatprep.subr.mxu0 0.0
        %832 = vmatpush1.msra.mxu0 0.0
        %833 = vmatprep.subr.mxu0 0.0
        %834 = vmatpush1.msra.mxu0 0.0
        %835 = vmatprep.subr.mxu0 0.0
        %836 = vmatpush1.msra.mxu0 0.0
        %837 = vmatprep.subr.mxu0 0.0
        %838 = vmatpush1.msra.mxu0 0.0
        %839 = vmatprep.subr.mxu0 0.0
        %840 = vmatpush1.msra.mxu0 0.0
        %841 = vmatprep.subr.mxu0 0.0
        %842 = vmatpush1.msra.mxu0 0.0
        %843 = vmatprep.subr.mxu0 0.0
        %844 = vmatpush1.msra.mxu0 0.0
        %845 = vmatprep.subr.mxu0 0.0
        %846 = vmatpush1.msra.mxu0 0.0
        %847 = vmatprep.subr.mxu0 0.0
        %848 = vmatpush1.msra.mxu0 0.0
        %849 = vmatprep.subr.mxu0 0.0
        %850 = vmatpush1.msra.mxu0 0.0
        %851 = vmatprep.subr.mxu0 0.0
        %852 = vmatpush1.msra.mxu0 0.0
        %853 = vmatprep.subr.mxu0 0.0
        %854 = vmatpush1.msra.mxu0 0.0
        %855 = vmatprep.subr.mxu0 0.0
        %856 = vmatpush1.msra.mxu0 0.0
        %857 = vmatprep.subr.mxu0 0.0
        %858 = vmatpush1.msra.mxu0 0.0
        %859 = vmatprep.subr.mxu0 0.0
        %860 = vmatpush1.msra.mxu0 0.0
        %861 = vmatprep.subr.mxu0 0.0
        %862 = vmatpush1.msra.mxu0 0.0
        %863 = vmatprep.mubr.f32.mxu0 0.0
        %v864 = vand.u32 %v524, 4294901760
        %v865 = vsub.f32 %v524, %v864
        %866 = vmatmul.mubr.f32.gmra.mrb[0].mxu0 %v865
        %v867 = vpop.f32.mrb[0].mxu0
        %v868 = vadd.f32 %v764, %v867
        %v869 = vpop.f32.mrb[0].mxu0
        %870 = vdwg.mxu0
        %871 = vmatprep.subr.mxu0 0.0
        %v872 = vand.u32 %v504, 4294901760
        %873 = vmatpush1.msra.mxu0 %v872
        %874 = vmatprep.subr.mxu0 0.0
        %v875 = vand.u32 %v505, 4294901760
        %876 = vmatpush1.msra.mxu0 %v875
        %877 = vmatprep.subr.mxu0 0.0
        %v878 = vand.u32 %v506, 4294901760
        %879 = vmatpush1.msra.mxu0 %v878
        %880 = vmatprep.subr.mxu0 0.0
        %v881 = vand.u32 %v507, 4294901760
        %882 = vmatpush1.msra.mxu0 %v881
        %883 = vmatprep.subr.mxu0 0.0
        %v884 = vand.u32 %v508, 4294901760
        %885 = vmatpush1.msra.mxu0 %v884
        %886 = vmatprep.subr.mxu0 0.0
        %v887 = vand.u32 %v509, 4294901760
        %888 = vmatpush1.msra.mxu0 %v887
        %889 = vmatprep.subr.mxu0 0.0
        %v890 = vand.u32 %v510, 4294901760
        %891 = vmatpush1.msra.mxu0 %v890
        %892 = vmatprep.subr.mxu0 0.0
        %v893 = vand.u32 %v511, 4294901760
        %894 = vmatpush1.msra.mxu0 %v893
        %895 = vmatprep.subr.mxu0 0.0
        %v896 = vand.u32 %v512, 4294901760
        %897 = vmatpush1.msra.mxu0 %v896
        %898 = vmatprep.subr.mxu0 0.0
        %v899 = vand.u32 %v513, 4294901760
        %900 = vmatpush1.msra.mxu0 %v899
        %901 = vmatprep.subr.mxu0 0.0
        %v902 = vand.u32 %v514, 4294901760
        %903 = vmatpush1.msra.mxu0 %v902
        %904 = vmatprep.subr.mxu0 0.0
        %v905 = vand.u32 %v515, 4294901760
        %906 = vmatpush1.msra.mxu0 %v905
        %907 = vmatprep.subr.mxu0 0.0
        %v908 = vand.u32 %v516, 4294901760
        %909 = vmatpush1.msra.mxu0 %v908
        %910 = vmatprep.subr.mxu0 0.0
        %v911 = vand.u32 %v517, 4294901760
        %912 = vmatpush1.msra.mxu0 %v911
        %913 = vmatprep.subr.mxu0 0.0
        %v914 = vand.u32 %v518, 4294901760
        %915 = vmatpush1.msra.mxu0 %v914
        %916 = vmatprep.subr.mxu0 0.0
        %v917 = vand.u32 %v519, 4294901760
        %918 = vmatpush1.msra.mxu0 %v917
        %919 = vmatprep.subr.mxu0 0.0
        %920 = vmatpush1.msra.mxu0 0.0
        %921 = vmatprep.subr.mxu0 0.0
        %922 = vmatpush1.msra.mxu0 0.0
        %923 = vmatprep.subr.mxu0 0.0
        %924 = vmatpush1.msra.mxu0 0.0
        %925 = vmatprep.subr.mxu0 0.0
        %926 = vmatpush1.msra.mxu0 0.0
        %927 = vmatprep.subr.mxu0 0.0
        %928 = vmatpush1.msra.mxu0 0.0
        %929 = vmatprep.subr.mxu0 0.0
        %930 = vmatpush1.msra.mxu0 0.0
        %931 = vmatprep.subr.mxu0 0.0
        %932 = vmatpush1.msra.mxu0 0.0
        %933 = vmatprep.subr.mxu0 0.0
        %934 = vmatpush1.msra.mxu0 0.0
        %935 = vmatprep.subr.mxu0 0.0
        %936 = vmatpush1.msra.mxu0 0.0
        %937 = vmatprep.subr.mxu0 0.0
        %938 = vmatpush1.msra.mxu0 0.0
        %939 = vmatprep.subr.mxu0 0.0
        %940 = vmatpush1.msra.mxu0 0.0
        %941 = vmatprep.subr.mxu0 0.0
        %942 = vmatpush1.msra.mxu0 0.0
        %943 = vmatprep.subr.mxu0 0.0
        %944 = vmatpush1.msra.mxu0 0.0
        %945 = vmatprep.subr.mxu0 0.0
        %946 = vmatpush1.msra.mxu0 0.0
        %947 = vmatprep.subr.mxu0 0.0
        %948 = vmatpush1.msra.mxu0 0.0
        %949 = vmatprep.subr.mxu0 0.0
        %950 = vmatpush1.msra.mxu0 0.0
        %951 = vmatprep.mubr.f32.mxu0 0.0
        %v952 = vand.u32 %v524, 4294901760
        %v953 = vsub.f32 %v524, %v952
        %v954 = vand.u32 %v953, 4294901760
        %955 = vmatmul.mubr.f32.gmra.mrb[0].mxu0 %v954
        %v956 = vpop.f32.mrb[0].mxu0
        %v957 = vadd.f32 %v868, %v956
        %v958 = vpop.f32.mrb[0].mxu0
        %959 = vdwg.mxu0
        %960 = vmatprep.subr.mxu0 0.0
        %v961 = vand.u32 %v504, 4294901760
        %v962 = vsub.f32 %v504, %v961
        %v963 = vand.u32 %v962, 4294901760
        %964 = vmatpush1.msra.mxu0 %v963
        %965 = vmatprep.subr.mxu0 0.0
        %v966 = vand.u32 %v505, 4294901760
        %v967 = vsub.f32 %v505, %v966
        %v968 = vand.u32 %v967, 4294901760
        %969 = vmatpush1.msra.mxu0 %v968
        %970 = vmatprep.subr.mxu0 0.0
        %v971 = vand.u32 %v506, 4294901760
        %v972 = vsub.f32 %v506, %v971
        %v973 = vand.u32 %v972, 4294901760
        %974 = vmatpush1.msra.mxu0 %v973
        %975 = vmatprep.subr.mxu0 0.0
        %v976 = vand.u32 %v507, 4294901760
        %v977 = vsub.f32 %v507, %v976
        %v978 = vand.u32 %v977, 4294901760
        %979 = vmatpush1.msra.mxu0 %v978
        %980 = vmatprep.subr.mxu0 0.0
        %v981 = vand.u32 %v508, 4294901760
        %v982 = vsub.f32 %v508, %v981
        %v983 = vand.u32 %v982, 4294901760
        %984 = vmatpush1.msra.mxu0 %v983
        %985 = vmatprep.subr.mxu0 0.0
        %v986 = vand.u32 %v509, 4294901760
        %v987 = vsub.f32 %v509, %v986
        %v988 = vand.u32 %v987, 4294901760
        %989 = vmatpush1.msra.mxu0 %v988
        %990 = vmatprep.subr.mxu0 0.0
        %v991 = vand.u32 %v510, 4294901760
        %v992 = vsub.f32 %v510, %v991
        %v993 = vand.u32 %v992, 4294901760
        %994 = vmatpush1.msra.mxu0 %v993
        %995 = vmatprep.subr.mxu0 0.0
        %v996 = vand.u32 %v511, 4294901760
        %v997 = vsub.f32 %v511, %v996
        %v998 = vand.u32 %v997, 4294901760
        %999 = vmatpush1.msra.mxu0 %v998
        %1000 = vmatprep.subr.mxu0 0.0
        %v1001 = vand.u32 %v512, 4294901760
        %v1002 = vsub.f32 %v512, %v1001
        %v1003 = vand.u32 %v1002, 4294901760
        %1004 = vmatpush1.msra.mxu0 %v1003
        %1005 = vmatprep.subr.mxu0 0.0
        %v1006 = vand.u32 %v513, 4294901760
        %v1007 = vsub.f32 %v513, %v1006
        %v1008 = vand.u32 %v1007, 4294901760
        %1009 = vmatpush1.msra.mxu0 %v1008
        %1010 = vmatprep.subr.mxu0 0.0
        %v1011 = vand.u32 %v514, 4294901760
        %v1012 = vsub.f32 %v514, %v1011
        %v1013 = vand.u32 %v1012, 4294901760
        %1014 = vmatpush1.msra.mxu0 %v1013
        %1015 = vmatprep.subr.mxu0 0.0
        %v1016 = vand.u32 %v515, 4294901760
        %v1017 = vsub.f32 %v515, %v1016
        %v1018 = vand.u32 %v1017, 4294901760
        %1019 = vmatpush1.msra.mxu0 %v1018
        %1020 = vmatprep.subr.mxu0 0.0
        %v1021 = vand.u32 %v516, 4294901760
        %v1022 = vsub.f32 %v516, %v1021
        %v1023 = vand.u32 %v1022, 4294901760
        %1024 = vmatpush1.msra.mxu0 %v1023
        %1025 = vmatprep.subr.mxu0 0.0
        %v1026 = vand.u32 %v517, 4294901760
        %v1027 = vsub.f32 %v517, %v1026
        %v1028 = vand.u32 %v1027, 4294901760
        %1029 = vmatpush1.msra.mxu0 %v1028
        %1030 = vmatprep.subr.mxu0 0.0
        %v1031 = vand.u32 %v518, 4294901760
        %v1032 = vsub.f32 %v518, %v1031
        %v1033 = vand.u32 %v1032, 4294901760
        %1034 = vmatpush1.msra.mxu0 %v1033
        %1035 = vmatprep.subr.mxu0 0.0
        %v1036 = vand.u32 %v519, 4294901760
        %v1037 = vsub.f32 %v519, %v1036
        %v1038 = vand.u32 %v1037, 4294901760
        %1039 = vmatpush1.msra.mxu0 %v1038
        %1040 = vmatprep.subr.mxu0 0.0
        %1041 = vmatpush1.msra.mxu0 0.0
        %1042 = vmatprep.subr.mxu0 0.0
        %1043 = vmatpush1.msra.mxu0 0.0
        %1044 = vmatprep.subr.mxu0 0.0
        %1045 = vmatpush1.msra.mxu0 0.0
        %1046 = vmatprep.subr.mxu0 0.0
        %1047 = vmatpush1.msra.mxu0 0.0
        %1048 = vmatprep.subr.mxu0 0.0
        %1049 = vmatpush1.msra.mxu0 0.0
        %1050 = vmatprep.subr.mxu0 0.0
        %1051 = vmatpush1.msra.mxu0 0.0
        %1052 = vmatprep.subr.mxu0 0.0
        %1053 = vmatpush1.msra.mxu0 0.0
        %1054 = vmatprep.subr.mxu0 0.0
        %1055 = vmatpush1.msra.mxu0 0.0
        %1056 = vmatprep.subr.mxu0 0.0
        %1057 = vmatpush1.msra.mxu0 0.0
        %1058 = vmatprep.subr.mxu0 0.0
        %1059 = vmatpush1.msra.mxu0 0.0
        %1060 = vmatprep.subr.mxu0 0.0
        %1061 = vmatpush1.msra.mxu0 0.0
        %1062 = vmatprep.subr.mxu0 0.0
        %1063 = vmatpush1.msra.mxu0 0.0
        %1064 = vmatprep.subr.mxu0 0.0
        %1065 = vmatpush1.msra.mxu0 0.0
        %1066 = vmatprep.subr.mxu0 0.0
        %1067 = vmatpush1.msra.mxu0 0.0
        %1068 = vmatprep.subr.mxu0 0.0
        %1069 = vmatpush1.msra.mxu0 0.0
        %1070 = vmatprep.subr.mxu0 0.0
        %1071 = vmatpush1.msra.mxu0 0.0
        %1072 = vmatprep.mubr.f32.mxu0 0.0
        %v1073 = vand.u32 %v524, 4294901760
        %1074 = vmatmul.mubr.f32.gmra.mrb[0].mxu0 %v1073
        %v1075 = vpop.f32.mrb[0].mxu0
        %v1076 = vadd.f32 %v957, %v1075
        %v1077 = vpop.f32.mrb[0].mxu0
        %1078 = vdwg.mxu0
        %1079 = vmatprep.subr.mxu0 0.0
        %v1080 = vand.u32 %v504, 4294901760
        %1081 = vmatpush1.msra.mxu0 %v1080
        %1082 = vmatprep.subr.mxu0 0.0
        %v1083 = vand.u32 %v505, 4294901760
        %1084 = vmatpush1.msra.mxu0 %v1083
        %1085 = vmatprep.subr.mxu0 0.0
        %v1086 = vand.u32 %v506, 4294901760
        %1087 = vmatpush1.msra.mxu0 %v1086
        %1088 = vmatprep.subr.mxu0 0.0
        %v1089 = vand.u32 %v507, 4294901760
        %1090 = vmatpush1.msra.mxu0 %v1089
        %1091 = vmatprep.subr.mxu0 0.0
        %v1092 = vand.u32 %v508, 4294901760
        %1093 = vmatpush1.msra.mxu0 %v1092
        %1094 = vmatprep.subr.mxu0 0.0
        %v1095 = vand.u32 %v509, 4294901760
        %1096 = vmatpush1.msra.mxu0 %v1095
        %1097 = vmatprep.subr.mxu0 0.0
        %v1098 = vand.u32 %v510, 4294901760
        %1099 = vmatpush1.msra.mxu0 %v1098
        %1100 = vmatprep.subr.mxu0 0.0
        %v1101 = vand.u32 %v511, 4294901760
        %1102 = vmatpush1.msra.mxu0 %v1101
        %1103 = vmatprep.subr.mxu0 0.0
        %v1104 = vand.u32 %v512, 4294901760
        %1105 = vmatpush1.msra.mxu0 %v1104
        %1106 = vmatprep.subr.mxu0 0.0
        %v1107 = vand.u32 %v513, 4294901760
        %1108 = vmatpush1.msra.mxu0 %v1107
        %1109 = vmatprep.subr.mxu0 0.0
        %v1110 = vand.u32 %v514, 4294901760
        %1111 = vmatpush1.msra.mxu0 %v1110
        %1112 = vmatprep.subr.mxu0 0.0
        %v1113 = vand.u32 %v515, 4294901760
        %1114 = vmatpush1.msra.mxu0 %v1113
        %1115 = vmatprep.subr.mxu0 0.0
        %v1116 = vand.u32 %v516, 4294901760
        %1117 = vmatpush1.msra.mxu0 %v1116
        %1118 = vmatprep.subr.mxu0 0.0
        %v1119 = vand.u32 %v517, 4294901760
        %1120 = vmatpush1.msra.mxu0 %v1119
        %1121 = vmatprep.subr.mxu0 0.0
        %v1122 = vand.u32 %v518, 4294901760
        %1123 = vmatpush1.msra.mxu0 %v1122
        %1124 = vmatprep.subr.mxu0 0.0
        %v1125 = vand.u32 %v519, 4294901760
        %1126 = vmatpush1.msra.mxu0 %v1125
        %1127 = vmatprep.subr.mxu0 0.0
        %1128 = vmatpush1.msra.mxu0 0.0
        %1129 = vmatprep.subr.mxu0 0.0
        %1130 = vmatpush1.msra.mxu0 0.0
        %1131 = vmatprep.subr.mxu0 0.0
        %1132 = vmatpush1.msra.mxu0 0.0
        %1133 = vmatprep.subr.mxu0 0.0
        %1134 = vmatpush1.msra.mxu0 0.0
        %1135 = vmatprep.subr.mxu0 0.0
        %1136 = vmatpush1.msra.mxu0 0.0
        %1137 = vmatprep.subr.mxu0 0.0
        %1138 = vmatpush1.msra.mxu0 0.0
        %1139 = vmatprep.subr.mxu0 0.0
        %1140 = vmatpush1.msra.mxu0 0.0
        %1141 = vmatprep.subr.mxu0 0.0
        %1142 = vmatpush1.msra.mxu0 0.0
        %1143 = vmatprep.subr.mxu0 0.0
        %1144 = vmatpush1.msra.mxu0 0.0
        %1145 = vmatprep.subr.mxu0 0.0
        %1146 = vmatpush1.msra.mxu0 0.0
        %1147 = vmatprep.subr.mxu0 0.0
        %1148 = vmatpush1.msra.mxu0 0.0
        %1149 = vmatprep.subr.mxu0 0.0
        %1150 = vmatpush1.msra.mxu0 0.0
        %1151 = vmatprep.subr.mxu0 0.0
        %1152 = vmatpush1.msra.mxu0 0.0
        %1153 = vmatprep.subr.mxu0 0.0
        %1154 = vmatpush1.msra.mxu0 0.0
        %1155 = vmatprep.subr.mxu0 0.0
        %1156 = vmatpush1.msra.mxu0 0.0
        %1157 = vmatprep.subr.mxu0 0.0
        %1158 = vmatpush1.msra.mxu0 0.0
        %1159 = vmatprep.mubr.f32.mxu0 0.0
        %v1160 = vand.u32 %v524, 4294901760
        %1161 = vmatmul.mubr.f32.gmra.mrb[0].mxu0 %v1160
        %v1162 = vpop.f32.mrb[0].mxu0
        %v1163 = vadd.f32 %v1076, %v1162
        %v1164 = vpop.f32.mrb[0].mxu0
        %1165 = vdwg.mxu0
        %v1166 = vld [vmem:[%s214] sm:$0x1]
        %v1167 = vlaneseq
        %v1168 = vshrl.u32 %v1167, 7
        %v1169 = vsub.s32 0, %v1168
        %v1170 = vrot.slane %v1166, %v1169
        %vm1171 = vcmp.eq.s32.totalorder %v246, %v1170
        %vm1172 = vcmp.eq.s32.totalorder %v247, %v1170
        %vm1173 = vcmp.eq.s32.totalorder %v248, %v1170
        %vm1174 = vcmp.eq.s32.totalorder %v249, %v1170
        %v1175 = vsel %vm1171, 1, 0
        %v1176 = vsel %vm1172, 1, 0
        %v1177 = vsel %vm1173, 1, 0
        %v1178 = vsel %vm1174, 1, 0
        %v1179 = vcvt.s32.f32 %v1175
        %v1180 = vcvt.s32.f32 %v1176
        %v1181 = vcvt.s32.f32 %v1177
        %v1182 = vcvt.s32.f32 %v1178
        %1183 = vmatprep.subr.mxu0 0.0
        %v1184 = vand.u32 %v311, 4294901760
        %1185 = vmatpush1.msra.mxu0 %v1184
        %1186 = vmatprep.subr.mxu0 0.0
        %v1187 = vand.u32 %v312, 4294901760
        %1188 = vmatpush1.msra.mxu0 %v1187
        %1189 = vmatprep.subr.mxu0 0.0
        %v1190 = vand.u32 %v313, 4294901760
        %1191 = vmatpush1.msra.mxu0 %v1190
        %1192 = vmatprep.subr.mxu0 0.0
        %v1193 = vand.u32 %v314, 4294901760
        %1194 = vmatpush1.msra.mxu0 %v1193
        %1195 = vmatprep.subr.mxu0 0.0
        %v1196 = vand.u32 %v315, 4294901760
        %1197 = vmatpush1.msra.mxu0 %v1196
        %1198 = vmatprep.subr.mxu0 0.0
        %v1199 = vand.u32 %v316, 4294901760
        %1200 = vmatpush1.msra.mxu0 %v1199
        %1201 = vmatprep.subr.mxu0 0.0
        %v1202 = vand.u32 %v317, 4294901760
        %1203 = vmatpush1.msra.mxu0 %v1202
        %1204 = vmatprep.subr.mxu0 0.0
        %v1205 = vand.u32 %v318, 4294901760
        %1206 = vmatpush1.msra.mxu0 %v1205
        %1207 = vmatprep.subr.mxu0 0.0
        %v1208 = vand.u32 %v319, 4294901760
        %1209 = vmatpush1.msra.mxu0 %v1208
        %1210 = vmatprep.subr.mxu0 0.0
        %v1211 = vand.u32 %v320, 4294901760
        %1212 = vmatpush1.msra.mxu0 %v1211
        %1213 = vmatprep.subr.mxu0 0.0
        %v1214 = vand.u32 %v321, 4294901760
        %1215 = vmatpush1.msra.mxu0 %v1214
        %1216 = vmatprep.subr.mxu0 0.0
        %v1217 = vand.u32 %v322, 4294901760
        %1218 = vmatpush1.msra.mxu0 %v1217
        %1219 = vmatprep.subr.mxu0 0.0
        %v1220 = vand.u32 %v323, 4294901760
        %1221 = vmatpush1.msra.mxu0 %v1220
        %1222 = vmatprep.subr.mxu0 0.0
        %v1223 = vand.u32 %v324, 4294901760
        %1224 = vmatpush1.msra.mxu0 %v1223
        %1225 = vmatprep.subr.mxu0 0.0
        %v1226 = vand.u32 %v325, 4294901760
        %1227 = vmatpush1.msra.mxu0 %v1226
        %1228 = vmatprep.subr.mxu0 0.0
        %v1229 = vand.u32 %v326, 4294901760
        %1230 = vmatpush1.msra.mxu0 %v1229
        %1231 = vmatprep.subr.mxu0 0.0
        %1232 = vmatpush1.msra.mxu0 0.0
        %1233 = vmatprep.subr.mxu0 0.0
        %1234 = vmatpush1.msra.mxu0 0.0
        %1235 = vmatprep.subr.mxu0 0.0
        %1236 = vmatpush1.msra.mxu0 0.0
        %1237 = vmatprep.subr.mxu0 0.0
        %1238 = vmatpush1.msra.mxu0 0.0
        %1239 = vmatprep.subr.mxu0 0.0
        %1240 = vmatpush1.msra.mxu0 0.0
        %1241 = vmatprep.subr.mxu0 0.0
        %1242 = vmatpush1.msra.mxu0 0.0
        %1243 = vmatprep.subr.mxu0 0.0
        %1244 = vmatpush1.msra.mxu0 0.0
        %1245 = vmatprep.subr.mxu0 0.0
        %1246 = vmatpush1.msra.mxu0 0.0
        %1247 = vmatprep.subr.mxu0 0.0
        %1248 = vmatpush1.msra.mxu0 0.0
        %1249 = vmatprep.subr.mxu0 0.0
        %1250 = vmatpush1.msra.mxu0 0.0
        %1251 = vmatprep.subr.mxu0 0.0
        %1252 = vmatpush1.msra.mxu0 0.0
        %1253 = vmatprep.subr.mxu0 0.0
        %1254 = vmatpush1.msra.mxu0 0.0
        %1255 = vmatprep.subr.mxu0 0.0
        %1256 = vmatpush1.msra.mxu0 0.0
        %1257 = vmatprep.subr.mxu0 0.0
        %1258 = vmatpush1.msra.mxu0 0.0
        %1259 = vmatprep.subr.mxu0 0.0
        %1260 = vmatpush1.msra.mxu0 0.0
        %1261 = vmatprep.subr.mxu0 0.0
        %1262 = vmatpush1.msra.mxu0 0.0
        %1263 = vmatprep.mubr.f32.mxu0 0.0
        %v1264 = vand.u32 %v1179, 4294901760
        %v1265 = vsub.f32 %v1179, %v1264
        %v1266 = vand.u32 %v1265, 4294901760
        %v1267 = vsub.f32 %v1265, %v1266
        %v1268 = vand.u32 %v1267, 4294901760
        %1269 = vmatmul.mubr.f32.gmra.mrb[0].mxu0 %v1268
        %v1270 = vpop.f32.mrb[0].mxu0
        %v1271 = vadd.f32 0.0, %v1270
        %v1272 = vpop.f32.mrb[0].mxu0
        %1273 = vmatprep.mubr.f32.mxu0 0.0
        %v1274 = vand.u32 %v1180, 4294901760
        %v1275 = vsub.f32 %v1180, %v1274
        %v1276 = vand.u32 %v1275, 4294901760
        %v1277 = vsub.f32 %v1275, %v1276
        %v1278 = vand.u32 %v1277, 4294901760
        %1279 = vmatmul.mubr.f32.gmra.mrb[0].mxu0 %v1278
        %v1280 = vpop.f32.mrb[0].mxu0
        %v1281 = vadd.f32 0.0, %v1280
        %v1282 = vpop.f32.mrb[0].mxu0
        %1283 = vmatprep.mubr.f32.mxu0 0.0
        %v1284 = vand.u32 %v1181, 4294901760
        %v1285 = vsub.f32 %v1181, %v1284
        %v1286 = vand.u32 %v1285, 4294901760
        %v1287 = vsub.f32 %v1285, %v1286
        %v1288 = vand.u32 %v1287, 4294901760
        %1289 = vmatmul.mubr.f32.gmra.mrb[0].mxu0 %v1288
        %v1290 = vpop.f32.mrb[0].mxu0
        %v1291 = vadd.f32 0.0, %v1290
        %v1292 = vpop.f32.mrb[0].mxu0
        %1293 = vmatprep.mubr.f32.mxu0 0.0
        %v1294 = vand.u32 %v1182, 4294901760
        %v1295 = vsub.f32 %v1182, %v1294
        %v1296 = vand.u32 %v1295, 4294901760
        %v1297 = vsub.f32 %v1295, %v1296
        %v1298 = vand.u32 %v1297, 4294901760
        %1299 = vmatmul.mubr.f32.gmra.mrb[0].mxu0 %v1298
        %v1300 = vpop.f32.mrb[0].mxu0
        %v1301 = vadd.f32 0.0, %v1300
        %v1302 = vpop.f32.mrb[0].mxu0
        %1303 = vdwg.mxu0
        %1304 = vmatprep.subr.mxu0 0.0
        %v1305 = vand.u32 %v311, 4294901760
        %v1306 = vsub.f32 %v311, %v1305
        %v1307 = vand.u32 %v1306, 4294901760
        %v1308 = vsub.f32 %v1306, %v1307
        %v1309 = vand.u32 %v1308, 4294901760
        %1310 = vmatpush1.msra.mxu0 %v1309
        %1311 = vmatprep.subr.mxu0 0.0
        %v1312 = vand.u32 %v312, 4294901760
        %v1313 = vsub.f32 %v312, %v1312
        %v1314 = vand.u32 %v1313, 4294901760
        %v1315 = vsub.f32 %v1313, %v1314
        %v1316 = vand.u32 %v1315, 4294901760
        %1317 = vmatpush1.msra.mxu0 %v1316
        %1318 = vmatprep.subr.mxu0 0.0
        %v1319 = vand.u32 %v313, 4294901760
        %v1320 = vsub.f32 %v313, %v1319
        %v1321 = vand.u32 %v1320, 4294901760
        %v1322 = vsub.f32 %v1320, %v1321
        %v1323 = vand.u32 %v1322, 4294901760
        %1324 = vmatpush1.msra.mxu0 %v1323
        %1325 = vmatprep.subr.mxu0 0.0
        %v1326 = vand.u32 %v314, 4294901760
        %v1327 = vsub.f32 %v314, %v1326
        %v1328 = vand.u32 %v1327, 4294901760
        %v1329 = vsub.f32 %v1327, %v1328
        %v1330 = vand.u32 %v1329, 4294901760
        %1331 = vmatpush1.msra.mxu0 %v1330
        %1332 = vmatprep.subr.mxu0 0.0
        %v1333 = vand.u32 %v315, 4294901760
        %v1334 = vsub.f32 %v315, %v1333
        %v1335 = vand.u32 %v1334, 4294901760
        %v1336 = vsub.f32 %v1334, %v1335
        %v1337 = vand.u32 %v1336, 4294901760
        %1338 = vmatpush1.msra.mxu0 %v1337
        %1339 = vmatprep.subr.mxu0 0.0
        %v1340 = vand.u32 %v316, 4294901760
        %v1341 = vsub.f32 %v316, %v1340
        %v1342 = vand.u32 %v1341, 4294901760
        %v1343 = vsub.f32 %v1341, %v1342
        %v1344 = vand.u32 %v1343, 4294901760
        %1345 = vmatpush1.msra.mxu0 %v1344
        %1346 = vmatprep.subr.mxu0 0.0
        %v1347 = vand.u32 %v317, 4294901760
        %v1348 = vsub.f32 %v317, %v1347
        %v1349 = vand.u32 %v1348, 4294901760
        %v1350 = vsub.f32 %v1348, %v1349
        %v1351 = vand.u32 %v1350, 4294901760
        %1352 = vmatpush1.msra.mxu0 %v1351
        %1353 = vmatprep.subr.mxu0 0.0
        %v1354 = vand.u32 %v318, 4294901760
        %v1355 = vsub.f32 %v318, %v1354
        %v1356 = vand.u32 %v1355, 4294901760
        %v1357 = vsub.f32 %v1355, %v1356
        %v1358 = vand.u32 %v1357, 4294901760
        %1359 = vmatpush1.msra.mxu0 %v1358
        %1360 = vmatprep.subr.mxu0 0.0
        %v1361 = vand.u32 %v319, 4294901760
        %v1362 = vsub.f32 %v319, %v1361
        %v1363 = vand.u32 %v1362, 4294901760
        %v1364 = vsub.f32 %v1362, %v1363
        %v1365 = vand.u32 %v1364, 4294901760
        %1366 = vmatpush1.msra.mxu0 %v1365
        %1367 = vmatprep.subr.mxu0 0.0
        %v1368 = vand.u32 %v320, 4294901760
        %v1369 = vsub.f32 %v320, %v1368
        %v1370 = vand.u32 %v1369, 4294901760
        %v1371 = vsub.f32 %v1369, %v1370
        %v1372 = vand.u32 %v1371, 4294901760
        %1373 = vmatpush1.msra.mxu0 %v1372
        %1374 = vmatprep.subr.mxu0 0.0
        %v1375 = vand.u32 %v321, 4294901760
        %v1376 = vsub.f32 %v321, %v1375
        %v1377 = vand.u32 %v1376, 4294901760
        %v1378 = vsub.f32 %v1376, %v1377
        %v1379 = vand.u32 %v1378, 4294901760
        %1380 = vmatpush1.msra.mxu0 %v1379
        %1381 = vmatprep.subr.mxu0 0.0
        %v1382 = vand.u32 %v322, 4294901760
        %v1383 = vsub.f32 %v322, %v1382
        %v1384 = vand.u32 %v1383, 4294901760
        %v1385 = vsub.f32 %v1383, %v1384
        %v1386 = vand.u32 %v1385, 4294901760
        %1387 = vmatpush1.msra.mxu0 %v1386
        %1388 = vmatprep.subr.mxu0 0.0
        %v1389 = vand.u32 %v323, 4294901760
        %v1390 = vsub.f32 %v323, %v1389
        %v1391 = vand.u32 %v1390, 4294901760
        %v1392 = vsub.f32 %v1390, %v1391
        %v1393 = vand.u32 %v1392, 4294901760
        %1394 = vmatpush1.msra.mxu0 %v1393
        %1395 = vmatprep.subr.mxu0 0.0
        %v1396 = vand.u32 %v324, 4294901760
        %v1397 = vsub.f32 %v324, %v1396
        %v1398 = vand.u32 %v1397, 4294901760
        %v1399 = vsub.f32 %v1397, %v1398
        %v1400 = vand.u32 %v1399, 4294901760
        %1401 = vmatpush1.msra.mxu0 %v1400
        %1402 = vmatprep.subr.mxu0 0.0
        %v1403 = vand.u32 %v325, 4294901760
        %v1404 = vsub.f32 %v325, %v1403
        %v1405 = vand.u32 %v1404, 4294901760
        %v1406 = vsub.f32 %v1404, %v1405
        %v1407 = vand.u32 %v1406, 4294901760
        %1408 = vmatpush1.msra.mxu0 %v1407
        %1409 = vmatprep.subr.mxu0 0.0
        %v1410 = vand.u32 %v326, 4294901760
        %v1411 = vsub.f32 %v326, %v1410
        %v1412 = vand.u32 %v1411, 4294901760
        %v1413 = vsub.f32 %v1411, %v1412
        %v1414 = vand.u32 %v1413, 4294901760
        %1415 = vmatpush1.msra.mxu0 %v1414
        %1416 = vmatprep.subr.mxu0 0.0
        %1417 = vmatpush1.msra.mxu0 0.0
        %1418 = vmatprep.subr.mxu0 0.0
        %1419 = vmatpush1.msra.mxu0 0.0
        %1420 = vmatprep.subr.mxu0 0.0
        %1421 = vmatpush1.msra.mxu0 0.0
        %1422 = vmatprep.subr.mxu0 0.0
        %1423 = vmatpush1.msra.mxu0 0.0
        %1424 = vmatprep.subr.mxu0 0.0
        %1425 = vmatpush1.msra.mxu0 0.0
        %1426 = vmatprep.subr.mxu0 0.0
        %1427 = vmatpush1.msra.mxu0 0.0
        %1428 = vmatprep.subr.mxu0 0.0
        %1429 = vmatpush1.msra.mxu0 0.0
        %1430 = vmatprep.subr.mxu0 0.0
        %1431 = vmatpush1.msra.mxu0 0.0
        %1432 = vmatprep.subr.mxu0 0.0
        %1433 = vmatpush1.msra.mxu0 0.0
        %1434 = vmatprep.subr.mxu0 0.0
        %1435 = vmatpush1.msra.mxu0 0.0
        %1436 = vmatprep.subr.mxu0 0.0
        %1437 = vmatpush1.msra.mxu0 0.0
        %1438 = vmatprep.subr.mxu0 0.0
        %1439 = vmatpush1.msra.mxu0 0.0
        %1440 = vmatprep.subr.mxu0 0.0
        %1441 = vmatpush1.msra.mxu0 0.0
        %1442 = vmatprep.subr.mxu0 0.0
        %1443 = vmatpush1.msra.mxu0 0.0
        %1444 = vmatprep.subr.mxu0 0.0
        %1445 = vmatpush1.msra.mxu0 0.0
        %1446 = vmatprep.subr.mxu0 0.0
        %1447 = vmatpush1.msra.mxu0 0.0
        %1448 = vmatprep.mubr.f32.mxu0 0.0
        %v1449 = vand.u32 %v1179, 4294901760
        %1450 = vmatmul.mubr.f32.gmra.mrb[0].mxu0 %v1449
        %v1451 = vpop.f32.mrb[0].mxu0
        %v1452 = vadd.f32 %v1271, %v1451
        %v1453 = vpop.f32.mrb[0].mxu0
        %1454 = vmatprep.mubr.f32.mxu0 0.0
        %v1455 = vand.u32 %v1180, 4294901760
        %1456 = vmatmul.mubr.f32.gmra.mrb[0].mxu0 %v1455
        %v1457 = vpop.f32.mrb[0].mxu0
        %v1458 = vadd.f32 %v1281, %v1457
        %v1459 = vpop.f32.mrb[0].mxu0
        %1460 = vmatprep.mubr.f32.mxu0 0.0
        %v1461 = vand.u32 %v1181, 4294901760
        %1462 = vmatmul.mubr.f32.gmra.mrb[0].mxu0 %v1461
        %v1463 = vpop.f32.mrb[0].mxu0
        %v1464 = vadd.f32 %v1291, %v1463
        %v1465 = vpop.f32.mrb[0].mxu0
        %1466 = vmatprep.mubr.f32.mxu0 0.0
        %v1467 = vand.u32 %v1182, 4294901760
        %1468 = vmatmul.mubr.f32.gmra.mrb[0].mxu0 %v1467
        %v1469 = vpop.f32.mrb[0].mxu0
        %v1470 = vadd.f32 %v1301, %v1469
        %v1471 = vpop.f32.mrb[0].mxu0
        %1472 = vdwg.mxu0
        %1473 = vmatprep.subr.mxu0 0.0
        %v1474 = vand.u32 %v311, 4294901760
        %v1475 = vsub.f32 %v311, %v1474
        %1476 = vmatpush1.msra.mxu0 %v1475
        %1477 = vmatprep.subr.mxu0 0.0
        %v1478 = vand.u32 %v312, 4294901760
        %v1479 = vsub.f32 %v312, %v1478
        %1480 = vmatpush1.msra.mxu0 %v1479
        %1481 = vmatprep.subr.mxu0 0.0
        %v1482 = vand.u32 %v313, 4294901760
        %v1483 = vsub.f32 %v313, %v1482
        %1484 = vmatpush1.msra.mxu0 %v1483
        %1485 = vmatprep.subr.mxu0 0.0
        %v1486 = vand.u32 %v314, 4294901760
        %v1487 = vsub.f32 %v314, %v1486
        %1488 = vmatpush1.msra.mxu0 %v1487
        %1489 = vmatprep.subr.mxu0 0.0
        %v1490 = vand.u32 %v315, 4294901760
        %v1491 = vsub.f32 %v315, %v1490
        %1492 = vmatpush1.msra.mxu0 %v1491
        %1493 = vmatprep.subr.mxu0 0.0
        %v1494 = vand.u32 %v316, 4294901760
        %v1495 = vsub.f32 %v316, %v1494
        %1496 = vmatpush1.msra.mxu0 %v1495
        %1497 = vmatprep.subr.mxu0 0.0
        %v1498 = vand.u32 %v317, 4294901760
        %v1499 = vsub.f32 %v317, %v1498
        %1500 = vmatpush1.msra.mxu0 %v1499
        %1501 = vmatprep.subr.mxu0 0.0
        %v1502 = vand.u32 %v318, 4294901760
        %v1503 = vsub.f32 %v318, %v1502
        %1504 = vmatpush1.msra.mxu0 %v1503
        %1505 = vmatprep.subr.mxu0 0.0
        %v1506 = vand.u32 %v319, 4294901760
        %v1507 = vsub.f32 %v319, %v1506
        %1508 = vmatpush1.msra.mxu0 %v1507
        %1509 = vmatprep.subr.mxu0 0.0
        %v1510 = vand.u32 %v320, 4294901760
        %v1511 = vsub.f32 %v320, %v1510
        %1512 = vmatpush1.msra.mxu0 %v1511
        %1513 = vmatprep.subr.mxu0 0.0
        %v1514 = vand.u32 %v321, 4294901760
        %v1515 = vsub.f32 %v321, %v1514
        %1516 = vmatpush1.msra.mxu0 %v1515
        %1517 = vmatprep.subr.mxu0 0.0
        %v1518 = vand.u32 %v322, 4294901760
        %v1519 = vsub.f32 %v322, %v1518
        %1520 = vmatpush1.msra.mxu0 %v1519
        %1521 = vmatprep.subr.mxu0 0.0
        %v1522 = vand.u32 %v323, 4294901760
        %v1523 = vsub.f32 %v323, %v1522
        %1524 = vmatpush1.msra.mxu0 %v1523
        %1525 = vmatprep.subr.mxu0 0.0
        %v1526 = vand.u32 %v324, 4294901760
        %v1527 = vsub.f32 %v324, %v1526
        %1528 = vmatpush1.msra.mxu0 %v1527
        %1529 = vmatprep.subr.mxu0 0.0
        %v1530 = vand.u32 %v325, 4294901760
        %v1531 = vsub.f32 %v325, %v1530
        %1532 = vmatpush1.msra.mxu0 %v1531
        %1533 = vmatprep.subr.mxu0 0.0
        %v1534 = vand.u32 %v326, 4294901760
        %v1535 = vsub.f32 %v326, %v1534
        %1536 = vmatpush1.msra.mxu0 %v1535
        %1537 = vmatprep.subr.mxu0 0.0
        %1538 = vmatpush1.msra.mxu0 0.0
        %1539 = vmatprep.subr.mxu0 0.0
        %1540 = vmatpush1.msra.mxu0 0.0
        %1541 = vmatprep.subr.mxu0 0.0
        %1542 = vmatpush1.msra.mxu0 0.0
        %1543 = vmatprep.subr.mxu0 0.0
        %1544 = vmatpush1.msra.mxu0 0.0
        %1545 = vmatprep.subr.mxu0 0.0
        %1546 = vmatpush1.msra.mxu0 0.0
        %1547 = vmatprep.subr.mxu0 0.0
        %1548 = vmatpush1.msra.mxu0 0.0
        %1549 = vmatprep.subr.mxu0 0.0
        %1550 = vmatpush1.msra.mxu0 0.0
        %1551 = vmatprep.subr.mxu0 0.0
        %1552 = vmatpush1.msra.mxu0 0.0
        %1553 = vmatprep.subr.mxu0 0.0
        %1554 = vmatpush1.msra.mxu0 0.0
        %1555 = vmatprep.subr.mxu0 0.0
        %1556 = vmatpush1.msra.mxu0 0.0
        %1557 = vmatprep.subr.mxu0 0.0
        %1558 = vmatpush1.msra.mxu0 0.0
        %1559 = vmatprep.subr.mxu0 0.0
        %1560 = vmatpush1.msra.mxu0 0.0
        %1561 = vmatprep.subr.mxu0 0.0
        %1562 = vmatpush1.msra.mxu0 0.0
        %1563 = vmatprep.subr.mxu0 0.0
        %1564 = vmatpush1.msra.mxu0 0.0
        %1565 = vmatprep.subr.mxu0 0.0
        %1566 = vmatpush1.msra.mxu0 0.0
        %1567 = vmatprep.subr.mxu0 0.0
        %1568 = vmatpush1.msra.mxu0 0.0
        %1569 = vmatprep.mubr.f32.mxu0 0.0
        %v1570 = vand.u32 %v1179, 4294901760
        %v1571 = vsub.f32 %v1179, %v1570
        %1572 = vmatmul.mubr.f32.gmra.mrb[0].mxu0 %v1571
        %v1573 = vpop.f32.mrb[0].mxu0
        %v1574 = vadd.f32 %v1452, %v1573
        %v1575 = vpop.f32.mrb[0].mxu0
        %1576 = vmatprep.mubr.f32.mxu0 0.0
        %v1577 = vand.u32 %v1180, 4294901760
        %v1578 = vsub.f32 %v1180, %v1577
        %1579 = vmatmul.mubr.f32.gmra.mrb[0].mxu0 %v1578
        %v1580 = vpop.f32.mrb[0].mxu0
        %v1581 = vadd.f32 %v1458, %v1580
        %v1582 = vpop.f32.mrb[0].mxu0
        %1583 = vmatprep.mubr.f32.mxu0 0.0
        %v1584 = vand.u32 %v1181, 4294901760
        %v1585 = vsub.f32 %v1181, %v1584
        %1586 = vmatmul.mubr.f32.gmra.mrb[0].mxu0 %v1585
        %v1587 = vpop.f32.mrb[0].mxu0
        %v1588 = vadd.f32 %v1464, %v1587
        %v1589 = vpop.f32.mrb[0].mxu0
        %1590 = vmatprep.mubr.f32.mxu0 0.0
        %v1591 = vand.u32 %v1182, 4294901760
        %v1592 = vsub.f32 %v1182, %v1591
        %1593 = vmatmul.mubr.f32.gmra.mrb[0].mxu0 %v1592
        %v1594 = vpop.f32.mrb[0].mxu0
        %v1595 = vadd.f32 %v1470, %v1594
        %v1596 = vpop.f32.mrb[0].mxu0
        %1597 = vdwg.mxu0
        %1598 = vmatprep.subr.mxu0 0.0
        %v1599 = vand.u32 %v311, 4294901760
        %1600 = vmatpush1.msra.mxu0 %v1599
        %1601 = vmatprep.subr.mxu0 0.0
        %v1602 = vand.u32 %v312, 4294901760
        %1603 = vmatpush1.msra.mxu0 %v1602
        %1604 = vmatprep.subr.mxu0 0.0
        %v1605 = vand.u32 %v313, 4294901760
        %1606 = vmatpush1.msra.mxu0 %v1605
        %1607 = vmatprep.subr.mxu0 0.0
        %v1608 = vand.u32 %v314, 4294901760
        %1609 = vmatpush1.msra.mxu0 %v1608
        %1610 = vmatprep.subr.mxu0 0.0
        %v1611 = vand.u32 %v315, 4294901760
        %1612 = vmatpush1.msra.mxu0 %v1611
        %1613 = vmatprep.subr.mxu0 0.0
        %v1614 = vand.u32 %v316, 4294901760
        %1615 = vmatpush1.msra.mxu0 %v1614
        %1616 = vmatprep.subr.mxu0 0.0
        %v1617 = vand.u32 %v317, 4294901760
        %1618 = vmatpush1.msra.mxu0 %v1617
        %1619 = vmatprep.subr.mxu0 0.0
        %v1620 = vand.u32 %v318, 4294901760
        %1621 = vmatpush1.msra.mxu0 %v1620
        %1622 = vmatprep.subr.mxu0 0.0
        %v1623 = vand.u32 %v319, 4294901760
        %1624 = vmatpush1.msra.mxu0 %v1623
        %1625 = vmatprep.subr.mxu0 0.0
        %v1626 = vand.u32 %v320, 4294901760
        %1627 = vmatpush1.msra.mxu0 %v1626
        %1628 = vmatprep.subr.mxu0 0.0
        %v1629 = vand.u32 %v321, 4294901760
        %1630 = vmatpush1.msra.mxu0 %v1629
        %1631 = vmatprep.subr.mxu0 0.0
        %v1632 = vand.u32 %v322, 4294901760
        %1633 = vmatpush1.msra.mxu0 %v1632
        %1634 = vmatprep.subr.mxu0 0.0
        %v1635 = vand.u32 %v323, 4294901760
        %1636 = vmatpush1.msra.mxu0 %v1635
        %1637 = vmatprep.subr.mxu0 0.0
        %v1638 = vand.u32 %v324, 4294901760
        %1639 = vmatpush1.msra.mxu0 %v1638
        %1640 = vmatprep.subr.mxu0 0.0
        %v1641 = vand.u32 %v325, 4294901760
        %1642 = vmatpush1.msra.mxu0 %v1641
        %1643 = vmatprep.subr.mxu0 0.0
        %v1644 = vand.u32 %v326, 4294901760
        %1645 = vmatpush1.msra.mxu0 %v1644
        %1646 = vmatprep.subr.mxu0 0.0
        %1647 = vmatpush1.msra.mxu0 0.0
        %1648 = vmatprep.subr.mxu0 0.0
        %1649 = vmatpush1.msra.mxu0 0.0
        %1650 = vmatprep.subr.mxu0 0.0
        %1651 = vmatpush1.msra.mxu0 0.0
        %1652 = vmatprep.subr.mxu0 0.0
        %1653 = vmatpush1.msra.mxu0 0.0
        %1654 = vmatprep.subr.mxu0 0.0
        %1655 = vmatpush1.msra.mxu0 0.0
        %1656 = vmatprep.subr.mxu0 0.0
        %1657 = vmatpush1.msra.mxu0 0.0
        %1658 = vmatprep.subr.mxu0 0.0
        %1659 = vmatpush1.msra.mxu0 0.0
        %1660 = vmatprep.subr.mxu0 0.0
        %1661 = vmatpush1.msra.mxu0 0.0
        %1662 = vmatprep.subr.mxu0 0.0
        %1663 = vmatpush1.msra.mxu0 0.0
        %1664 = vmatprep.subr.mxu0 0.0
        %1665 = vmatpush1.msra.mxu0 0.0
        %1666 = vmatprep.subr.mxu0 0.0
        %1667 = vmatpush1.msra.mxu0 0.0
        %1668 = vmatprep.subr.mxu0 0.0
        %1669 = vmatpush1.msra.mxu0 0.0
        %1670 = vmatprep.subr.mxu0 0.0
        %1671 = vmatpush1.msra.mxu0 0.0
        %1672 = vmatprep.subr.mxu0 0.0
        %1673 = vmatpush1.msra.mxu0 0.0
        %1674 = vmatprep.subr.mxu0 0.0
        %1675 = vmatpush1.msra.mxu0 0.0
        %1676 = vmatprep.subr.mxu0 0.0
        %1677 = vmatpush1.msra.mxu0 0.0
        %1678 = vmatprep.mubr.f32.mxu0 0.0
        %v1679 = vand.u32 %v1179, 4294901760
        %v1680 = vsub.f32 %v1179, %v1679
        %v1681 = vand.u32 %v1680, 4294901760
        %1682 = vmatmul.mubr.f32.gmra.mrb[0].mxu0 %v1681
        %v1683 = vpop.f32.mrb[0].mxu0
        %v1684 = vadd.f32 %v1574, %v1683
        %v1685 = vpop.f32.mrb[0].mxu0
        %1686 = vmatprep.mubr.f32.mxu0 0.0
        %v1687 = vand.u32 %v1180, 4294901760
        %v1688 = vsub.f32 %v1180, %v1687
        %v1689 = vand.u32 %v1688, 4294901760
        %1690 = vmatmul.mubr.f32.gmra.mrb[0].mxu0 %v1689
        %v1691 = vpop.f32.mrb[0].mxu0
        %v1692 = vadd.f32 %v1581, %v1691
        %v1693 = vpop.f32.mrb[0].mxu0
        %1694 = vmatprep.mubr.f32.mxu0 0.0
        %v1695 = vand.u32 %v1181, 4294901760
        %v1696 = vsub.f32 %v1181, %v1695
        %v1697 = vand.u32 %v1696, 4294901760
        %1698 = vmatmul.mubr.f32.gmra.mrb[0].mxu0 %v1697
        %v1699 = vpop.f32.mrb[0].mxu0
        %v1700 = vadd.f32 %v1588, %v1699
        %v1701 = vpop.f32.mrb[0].mxu0
        %1702 = vmatprep.mubr.f32.mxu0 0.0
        %v1703 = vand.u32 %v1182, 4294901760
        %v1704 = vsub.f32 %v1182, %v1703
        %v1705 = vand.u32 %v1704, 4294901760
        %1706 = vmatmul.mubr.f32.gmra.mrb[0].mxu0 %v1705
        %v1707 = vpop.f32.mrb[0].mxu0
        %v1708 = vadd.f32 %v1595, %v1707
        %v1709 = vpop.f32.mrb[0].mxu0
        %1710 = vdwg.mxu0
        %1711 = vmatprep.subr.mxu0 0.0
        %v1712 = vand.u32 %v311, 4294901760
        %v1713 = vsub.f32 %v311, %v1712
        %v1714 = vand.u32 %v1713, 4294901760
        %1715 = vmatpush1.msra.mxu0 %v1714
        %1716 = vmatprep.subr.mxu0 0.0
        %v1717 = vand.u32 %v312, 4294901760
        %v1718 = vsub.f32 %v312, %v1717
        %v1719 = vand.u32 %v1718, 4294901760
        %1720 = vmatpush1.msra.mxu0 %v1719
        %1721 = vmatprep.subr.mxu0 0.0
        %v1722 = vand.u32 %v313, 4294901760
        %v1723 = vsub.f32 %v313, %v1722
        %v1724 = vand.u32 %v1723, 4294901760
        %1725 = vmatpush1.msra.mxu0 %v1724
        %1726 = vmatprep.subr.mxu0 0.0
        %v1727 = vand.u32 %v314, 4294901760
        %v1728 = vsub.f32 %v314, %v1727
        %v1729 = vand.u32 %v1728, 4294901760
        %1730 = vmatpush1.msra.mxu0 %v1729
        %1731 = vmatprep.subr.mxu0 0.0
        %v1732 = vand.u32 %v315, 4294901760
        %v1733 = vsub.f32 %v315, %v1732
        %v1734 = vand.u32 %v1733, 4294901760
        %1735 = vmatpush1.msra.mxu0 %v1734
        %1736 = vmatprep.subr.mxu0 0.0
        %v1737 = vand.u32 %v316, 4294901760
        %v1738 = vsub.f32 %v316, %v1737
        %v1739 = vand.u32 %v1738, 4294901760
        %1740 = vmatpush1.msra.mxu0 %v1739
        %1741 = vmatprep.subr.mxu0 0.0
        %v1742 = vand.u32 %v317, 4294901760
        %v1743 = vsub.f32 %v317, %v1742
        %v1744 = vand.u32 %v1743, 4294901760
        %1745 = vmatpush1.msra.mxu0 %v1744
        %1746 = vmatprep.subr.mxu0 0.0
        %v1747 = vand.u32 %v318, 4294901760
        %v1748 = vsub.f32 %v318, %v1747
        %v1749 = vand.u32 %v1748, 4294901760
        %1750 = vmatpush1.msra.mxu0 %v1749
        %1751 = vmatprep.subr.mxu0 0.0
        %v1752 = vand.u32 %v319, 4294901760
        %v1753 = vsub.f32 %v319, %v1752
        %v1754 = vand.u32 %v1753, 4294901760
        %1755 = vmatpush1.msra.mxu0 %v1754
        %1756 = vmatprep.subr.mxu0 0.0
        %v1757 = vand.u32 %v320, 4294901760
        %v1758 = vsub.f32 %v320, %v1757
        %v1759 = vand.u32 %v1758, 4294901760
        %1760 = vmatpush1.msra.mxu0 %v1759
        %1761 = vmatprep.subr.mxu0 0.0
        %v1762 = vand.u32 %v321, 4294901760
        %v1763 = vsub.f32 %v321, %v1762
        %v1764 = vand.u32 %v1763, 4294901760
        %1765 = vmatpush1.msra.mxu0 %v1764
        %1766 = vmatprep.subr.mxu0 0.0
        %v1767 = vand.u32 %v322, 4294901760
        %v1768 = vsub.f32 %v322, %v1767
        %v1769 = vand.u32 %v1768, 4294901760
        %1770 = vmatpush1.msra.mxu0 %v1769
        %1771 = vmatprep.subr.mxu0 0.0
        %v1772 = vand.u32 %v323, 4294901760
        %v1773 = vsub.f32 %v323, %v1772
        %v1774 = vand.u32 %v1773, 4294901760
        %1775 = vmatpush1.msra.mxu0 %v1774
        %1776 = vmatprep.subr.mxu0 0.0
        %v1777 = vand.u32 %v324, 4294901760
        %v1778 = vsub.f32 %v324, %v1777
        %v1779 = vand.u32 %v1778, 4294901760
        %1780 = vmatpush1.msra.mxu0 %v1779
        %1781 = vmatprep.subr.mxu0 0.0
        %v1782 = vand.u32 %v325, 4294901760
        %v1783 = vsub.f32 %v325, %v1782
        %v1784 = vand.u32 %v1783, 4294901760
        %1785 = vmatpush1.msra.mxu0 %v1784
        %1786 = vmatprep.subr.mxu0 0.0
        %v1787 = vand.u32 %v326, 4294901760
        %v1788 = vsub.f32 %v326, %v1787
        %v1789 = vand.u32 %v1788, 4294901760
        %1790 = vmatpush1.msra.mxu0 %v1789
        %1791 = vmatprep.subr.mxu0 0.0
        %1792 = vmatpush1.msra.mxu0 0.0
        %1793 = vmatprep.subr.mxu0 0.0
        %1794 = vmatpush1.msra.mxu0 0.0
        %1795 = vmatprep.subr.mxu0 0.0
        %1796 = vmatpush1.msra.mxu0 0.0
        %1797 = vmatprep.subr.mxu0 0.0
        %1798 = vmatpush1.msra.mxu0 0.0
        %1799 = vmatprep.subr.mxu0 0.0
        %1800 = vmatpush1.msra.mxu0 0.0
        %1801 = vmatprep.subr.mxu0 0.0
        %1802 = vmatpush1.msra.mxu0 0.0
        %1803 = vmatprep.subr.mxu0 0.0
        %1804 = vmatpush1.msra.mxu0 0.0
        %1805 = vmatprep.subr.mxu0 0.0
        %1806 = vmatpush1.msra.mxu0 0.0
        %1807 = vmatprep.subr.mxu0 0.0
        %1808 = vmatpush1.msra.mxu0 0.0
        %1809 = vmatprep.subr.mxu0 0.0
        %1810 = vmatpush1.msra.mxu0 0.0
        %1811 = vmatprep.subr.mxu0 0.0
        %1812 = vmatpush1.msra.mxu0 0.0
        %1813 = vmatprep.subr.mxu0 0.0
        %1814 = vmatpush1.msra.mxu0 0.0
        %1815 = vmatprep.subr.mxu0 0.0
        %1816 = vmatpush1.msra.mxu0 0.0
        %1817 = vmatprep.subr.mxu0 0.0
        %1818 = vmatpush1.msra.mxu0 0.0
        %1819 = vmatprep.subr.mxu0 0.0
        %1820 = vmatpush1.msra.mxu0 0.0
        %1821 = vmatprep.subr.mxu0 0.0
        %1822 = vmatpush1.msra.mxu0 0.0
        %1823 = vmatprep.mubr.f32.mxu0 0.0
        %v1824 = vand.u32 %v1179, 4294901760
        %1825 = vmatmul.mubr.f32.gmra.mrb[0].mxu0 %v1824
        %v1826 = vpop.f32.mrb[0].mxu0
        %v1827 = vadd.f32 %v1684, %v1826
        %v1828 = vpop.f32.mrb[0].mxu0
        %1829 = vmatprep.mubr.f32.mxu0 0.0
        %v1830 = vand.u32 %v1180, 4294901760
        %1831 = vmatmul.mubr.f32.gmra.mrb[0].mxu0 %v1830
        %v1832 = vpop.f32.mrb[0].mxu0
        %v1833 = vadd.f32 %v1692, %v1832
        %v1834 = vpop.f32.mrb[0].mxu0
        %1835 = vmatprep.mubr.f32.mxu0 0.0
        %v1836 = vand.u32 %v1181, 4294901760
        %1837 = vmatmul.mubr.f32.gmra.mrb[0].mxu0 %v1836
        %v1838 = vpop.f32.mrb[0].mxu0
        %v1839 = vadd.f32 %v1700, %v1838
        %v1840 = vpop.f32.mrb[0].mxu0
        %1841 = vmatprep.mubr.f32.mxu0 0.0
        %v1842 = vand.u32 %v1182, 4294901760
        %1843 = vmatmul.mubr.f32.gmra.mrb[0].mxu0 %v1842
        %v1844 = vpop.f32.mrb[0].mxu0
        %v1845 = vadd.f32 %v1708, %v1844
        %v1846 = vpop.f32.mrb[0].mxu0
        %1847 = vdwg.mxu0
        %1848 = vmatprep.subr.mxu0 0.0
        %v1849 = vand.u32 %v311, 4294901760
        %1850 = vmatpush1.msra.mxu0 %v1849
        %1851 = vmatprep.subr.mxu0 0.0
        %v1852 = vand.u32 %v312, 4294901760
        %1853 = vmatpush1.msra.mxu0 %v1852
        %1854 = vmatprep.subr.mxu0 0.0
        %v1855 = vand.u32 %v313, 4294901760
        %1856 = vmatpush1.msra.mxu0 %v1855
        %1857 = vmatprep.subr.mxu0 0.0
        %v1858 = vand.u32 %v314, 4294901760
        %1859 = vmatpush1.msra.mxu0 %v1858
        %1860 = vmatprep.subr.mxu0 0.0
        %v1861 = vand.u32 %v315, 4294901760
        %1862 = vmatpush1.msra.mxu0 %v1861
        %1863 = vmatprep.subr.mxu0 0.0
        %v1864 = vand.u32 %v316, 4294901760
        %1865 = vmatpush1.msra.mxu0 %v1864
        %1866 = vmatprep.subr.mxu0 0.0
        %v1867 = vand.u32 %v317, 4294901760
        %1868 = vmatpush1.msra.mxu0 %v1867
        %1869 = vmatprep.subr.mxu0 0.0
        %v1870 = vand.u32 %v318, 4294901760
        %1871 = vmatpush1.msra.mxu0 %v1870
        %1872 = vmatprep.subr.mxu0 0.0
        %v1873 = vand.u32 %v319, 4294901760
        %1874 = vmatpush1.msra.mxu0 %v1873
        %1875 = vmatprep.subr.mxu0 0.0
        %v1876 = vand.u32 %v320, 4294901760
        %1877 = vmatpush1.msra.mxu0 %v1876
        %1878 = vmatprep.subr.mxu0 0.0
        %v1879 = vand.u32 %v321, 4294901760
        %1880 = vmatpush1.msra.mxu0 %v1879
        %1881 = vmatprep.subr.mxu0 0.0
        %v1882 = vand.u32 %v322, 4294901760
        %1883 = vmatpush1.msra.mxu0 %v1882
        %1884 = vmatprep.subr.mxu0 0.0
        %v1885 = vand.u32 %v323, 4294901760
        %1886 = vmatpush1.msra.mxu0 %v1885
        %1887 = vmatprep.subr.mxu0 0.0
        %v1888 = vand.u32 %v324, 4294901760
        %1889 = vmatpush1.msra.mxu0 %v1888
        %1890 = vmatprep.subr.mxu0 0.0
        %v1891 = vand.u32 %v325, 4294901760
        %1892 = vmatpush1.msra.mxu0 %v1891
        %1893 = vmatprep.subr.mxu0 0.0
        %v1894 = vand.u32 %v326, 4294901760
        %1895 = vmatpush1.msra.mxu0 %v1894
        %1896 = vmatprep.subr.mxu0 0.0
        %1897 = vmatpush1.msra.mxu0 0.0
        %1898 = vmatprep.subr.mxu0 0.0
        %1899 = vmatpush1.msra.mxu0 0.0
        %1900 = vmatprep.subr.mxu0 0.0
        %1901 = vmatpush1.msra.mxu0 0.0
        %1902 = vmatprep.subr.mxu0 0.0
        %1903 = vmatpush1.msra.mxu0 0.0
        %1904 = vmatprep.subr.mxu0 0.0
        %1905 = vmatpush1.msra.mxu0 0.0
        %1906 = vmatprep.subr.mxu0 0.0
        %1907 = vmatpush1.msra.mxu0 0.0
        %1908 = vmatprep.subr.mxu0 0.0
        %1909 = vmatpush1.msra.mxu0 0.0
        %1910 = vmatprep.subr.mxu0 0.0
        %1911 = vmatpush1.msra.mxu0 0.0
        %1912 = vmatprep.subr.mxu0 0.0
        %1913 = vmatpush1.msra.mxu0 0.0
        %1914 = vmatprep.subr.mxu0 0.0
        %1915 = vmatpush1.msra.mxu0 0.0
        %1916 = vmatprep.subr.mxu0 0.0
        %1917 = vmatpush1.msra.mxu0 0.0
        %1918 = vmatprep.subr.mxu0 0.0
        %1919 = vmatpush1.msra.mxu0 0.0
        %1920 = vmatprep.subr.mxu0 0.0
        %1921 = vmatpush1.msra.mxu0 0.0
        %1922 = vmatprep.subr.mxu0 0.0
        %1923 = vmatpush1.msra.mxu0 0.0
        %1924 = vmatprep.subr.mxu0 0.0
        %1925 = vmatpush1.msra.mxu0 0.0
        %1926 = vmatprep.subr.mxu0 0.0
        %1927 = vmatpush1.msra.mxu0 0.0
        %1928 = vmatprep.mubr.f32.mxu0 0.0
        %v1929 = vand.u32 %v1179, 4294901760
        %1930 = vmatmul.mubr.f32.gmra.mrb[0].mxu0 %v1929
        %v1931 = vpop.f32.mrb[0].mxu0
        %v1932 = vadd.f32 %v1827, %v1931
        %v1933 = vpop.f32.mrb[0].mxu0
        %1934 = vmatprep.mubr.f32.mxu0 0.0
        %v1935 = vand.u32 %v1180, 4294901760
        %1936 = vmatmul.mubr.f32.gmra.mrb[0].mxu0 %v1935
        %v1937 = vpop.f32.mrb[0].mxu0
        %v1938 = vadd.f32 %v1833, %v1937
        %v1939 = vpop.f32.mrb[0].mxu0
        %1940 = vmatprep.mubr.f32.mxu0 0.0
        %v1941 = vand.u32 %v1181, 4294901760
        %1942 = vmatmul.mubr.f32.gmra.mrb[0].mxu0 %v1941
        %v1943 = vpop.f32.mrb[0].mxu0
        %v1944 = vadd.f32 %v1839, %v1943
        %v1945 = vpop.f32.mrb[0].mxu0
        %1946 = vmatprep.mubr.f32.mxu0 0.0
        %v1947 = vand.u32 %v1182, 4294901760
        %1948 = vmatmul.mubr.f32.gmra.mrb[0].mxu0 %v1947
        %v1949 = vpop.f32.mrb[0].mxu0
        %v1950 = vadd.f32 %v1845, %v1949
        %v1951 = vpop.f32.mrb[0].mxu0
        %1952 = vdwg.mxu0
        %vm1953 = vcmp.eq.s32.totalorder %v246, %v521
        %vm1954 = vcmp.eq.s32.totalorder %v247, %v521
        %vm1955 = vcmp.eq.s32.totalorder %v248, %v521
        %vm1956 = vcmp.eq.s32.totalorder %v249, %v521
        %v1957 = vsel %vm1953, %v1932, 0.0
        %v1958 = vsel %vm1954, %v1938, 0.0
        %v1959 = vsel %vm1955, %v1944, 0.0
        %v1960 = vsel %vm1956, %v1950, 0.0
        %v1961 = vsel %vm327, %v1957, 0.0
        %v1962 = vsel %vm327, %v1958, 0.0
        %v1963 = vadd.f32 %v1961, %v1962
        %v1964 = vsel %vm327, %v1959, 0.0
        %v1965 = vadd.f32 %v1963, %v1964
        %v1966 = vsel %vm327, %v1960, 0.0
        %v1967 = vadd.f32 %v1965, %v1966
        %1968 = vadd.xlane.f32.xlu0 %v1967
        %v1969 = vpop.xlane.xlu0 %1968
        %v1970 = vrot.slane %v1969, 4
        %v1971 = vadd.f32 %v1969, %v1970
        %v1972 = vrot.slane %v1971, 2
        %v1973 = vadd.f32 %v1971, %v1972
        %v1974 = vrot.slane %v1973, 1
        %v1975 = vadd.f32 %v1973, %v1974
        %s1976 = vtos %v1975
        %v1977 = vld [vmem:[#allocation2] sm:$0x1]
        %v1978 = vstv %s1976
        %v1979 = vsub.f32 %v1163, %v1978
        %v1980 = vadd.f32 %v1977, %v1979
        %vm1981 = vcmask 0
        %1982 = vst.msk [vmem:[#allocation2] sm:$0x1] %vm1981, %v1980
        %p1983 = scmp.eq.s32.totalorder %s19, 2
        // Predicated region
        $region33: #{tpu_custom_call.1} parent=27 // pred_check
          %p1984 = pneg %p1983
        $region34: #{tpu_custom_call.1} parent=27 // pred_check_branch
          %1986 = sbr.rel (%p1984) target = $region36
        $region35: #{tpu_custom_call.1} parent=27 // pred_region
          %v1987 = vld [vmem:[#allocation2] sm:$0x1]
          %v1989 = vlaneseq
          %v1990 = vshrl.u32 %v1989, 7
          %v1991 = vsub.s32 0, %v1990
          %v1992 = vrot.slane %v1987, %v1991
          %1993 = vset.pattern.permute.xlu0 0
          %1994 = vperm.xlu0 %1993, %v1992
          %v1995 = vpop.permute.xlu0 %1994
          %1997 = vst [vmem:[#allocation3] sm:$0xff] %v1995
        $region36: #{tpu_custom_call.1} parent=27 // pred_fallthru
          _
        // Predicated region
        $region37: #{tpu_custom_call.1} parent=27 // pred_check
          %p1998 = pneg %p112
        $region38: #{tpu_custom_call.1} parent=27 // pred_check_branch
          %2000 = sbr.rel (%p1998) target = $region40
        $region39: #{tpu_custom_call.1} parent=27 // pred_region
          %s2002 = ssub.s32 128, 128
          %2003 = vsyncadd [#allocation4], %s2002
          %s2004 = smul.addr %s18, 128
          %s2005 = scalar_lea.hbm %s2, %s2004
          %s2007 = sshll.u32 [#allocation3], 4
          %s2008 = int_to_ptr.vmem [resolvable:$true] %s2007
          %2010 = dma.vmem_to_hbm [thread:$0]  %s2008, 128, %s2005, [#allocation4]
        $region40: #{tpu_custom_call.1} parent=27 // pred_fallthru
          _
        // Predicated region
        $region41: #{tpu_custom_call.1} parent=27 // pred_check
          %p2011 = pneg %p112
        $region42: #{tpu_custom_call.1} parent=27 // pred_check_branch
          %2013 = sbr.rel (%p2011) target = $region44
        $region43: #{tpu_custom_call.1} parent=27 // pred_region
          %2014 = dma.done [#allocation4], 128
        $region44: #{tpu_custom_call.1} parent=27 // pred_fallthru
          _
      $region28: #{tpu_custom_call.1} parent=5 // pred_fallthru
        _
      %p2015 = scmp.le.s32.totalorder 2, %s9
      // Predicated region
      $region45: #{tpu_custom_call.1} parent=5 // pred_check
        %p2016 = pneg %p2015
      $region46: #{tpu_custom_call.1} parent=5 // pred_check_branch
        %2018 = sbr.rel (%p2016) target = $region48
      $region47: #{tpu_custom_call.1} parent=5 // pred_region
        %s2019 = ssub.s32 %s9, 2
      $region48: #{tpu_custom_call.1} parent=5 // pred_fallthru
        _
    $region6: #{tpu_custom_call.1} parent=1 // loop_footer
      %s13 = sadd.s32 1, %s9
    $region7: #{tpu_custom_call.1} parent=1 // loop_footer_branch
      %8 = sbr.rel target = $region3
    $region8: #{tpu_custom_call.1} parent=1 // loop_exit
      _
    %2020 = vsyncpa [#allocation4], 1
    %s2021 = scalar_lea.sflag [#allocation4], 1
    %2022 = vsyncpa %s2021, 1

</llo_original>
